<compile_context>
chip_gen: v5e
topology: v5e:2x2
jax: 0.10.0
libtpu: 0.0.40
codegen_flags: <defaults>
</compile_context>

<pallas_src>
import jax
import jax.numpy as jnp
from jax.experimental import pallas as pl
from jax.experimental.pallas import tpu as pltpu

SPATIAL = 225          # 15 x 15 SqueezeNet-1.1 feature-map positions
FEAT_C = 512
HIDDEN = 128
LANES = 128            # minimum lane-dense output width


# ----------------------------- kernel -------------------------------------- #

def _softplus(x):
    # matches torch.nn.functional.softplus(beta=1, threshold=20)
    return jnp.where(x > 20.0, x, jnp.log1p(jnp.exp(jnp.minimum(x, 20.0))))


def fused_forward_kernel(sel_ref, scene_ref, sil_ref, x_ref, g1_ref, g2_ref, g3_ref,
                         ws_ref, bs_ref, wb_ref, bb_ref,
                         w1x_ref, w1cs_ref, w1cb_ref, b1_ref,
                         w2_ref, b2_ref, w3_ref, b3_ref,
                         w4_ref, b4_ref,
                         out_ref):
    """One batch tile of: 2x(AvgPool + Linear head) + concat + gamma-gated softplus MLP."""
    f32 = jnp.float32
    bf16 = jnp.bfloat16

    # -- classifier heads: AvgPool(15,15) + Linear, both on the MXU ---------- #
    # sel is a (bT, bT*225) 0/1 block matrix, so sel @ features computes each image's
    # per-channel spatial sum with f32 MXU accumulation — no VPU convert/reduce and
    # no f32 feature temporaries.  The 1/225 AvgPool factor is folded into the bf16
    # head weights (ws/wb).
    sel = sel_ref[...]                                                     # (bT, bT*225) bf16
    pooled_s = jnp.dot(sel, scene_ref[...], preferred_element_type=f32)   # (bT, 512)
    pooled_b = jnp.dot(sel, sil_ref[...], preferred_element_type=f32)     # (bT, 512)
    cond_s = (jnp.dot(pooled_s.astype(bf16), ws_ref[...],
                      preferred_element_type=f32) + bs_ref[...])          # (bT, cond_s)
    cond_b = (jnp.dot(pooled_b.astype(bf16), wb_ref[...],
                      preferred_element_type=f32) + bb_ref[...])          # (bT, cond_b)

    # -- conditional MLP (bf16 weights/activations, f32 accumulation) -------- #
    # lin1(concat([x, cond_scene, cond_silhouette])) folded into a 3-way split matmul:
    #   concat(x, cs, cb) @ W1 == x @ W1[:in] + cs @ W1[in:in+cs] + cb @ W1[in+cs:]
    h = (jnp.dot(x_ref[...].astype(bf16), w1x_ref[...], preferred_element_type=f32)
         + jnp.dot(cond_s.astype(bf16), w1cs_ref[...], preferred_element_type=f32)
         + jnp.dot(cond_b.astype(bf16), w1cb_ref[...], preferred_element_type=f32)
         + b1_ref[...])
    h = _softplus(g1_ref[...] * h)

    h = jnp.dot(h.astype(bf16), w2_ref[...], preferred_element_type=f32) + b2_ref[...]
    h = _softplus(g2_ref[...] * h)

    h = jnp.dot(h.astype(bf16), w3_ref[...], preferred_element_type=f32) + b3_ref[...]
    h = _softplus(g3_ref[...] * h)

    # lin4, lane-padded to >=128 output columns for unmasked vector stores.
    out_ref[...] = (jnp.dot(h.astype(bf16), w4_ref[...], preferred_element_type=f32)
                    + b4_ref[...])


# ----------------------------- parameters ---------------------------------- #

def init_params(key, n_steps, in_sz, cond_sz_scene, cond_sz_silhouette, hidden=HIDDEN):
    """Deterministic synthetic init mirroring the PyTorch module's parameter shapes,
    plus derived fused-kernel parameters (bf16 weights, 1/225 folded heads, split lin1,
    lane-padded lin4)."""
    ks = jax.random.split(key, 15)

    def linear(kw, kb, fan_in, fan_out):
        bound = 1.0 / jnp.sqrt(float(fan_in))
        w = jax.random.uniform(kw, (fan_in, fan_out), jnp.float32, -bound, bound)
        b = jax.random.uniform(kb, (1, fan_out), jnp.float32, -bound, bound)
        return w, b

    cond_total = cond_sz_scene + cond_sz_silhouette
    lin1_in = in_sz + cond_total

    w_scene, b_scene = linear(ks[0], ks[1], FEAT_C, cond_sz_scene)
    w_sil, b_sil = linear(ks[2], ks[3], FEAT_C, cond_sz_silhouette)
    w1, b1 = linear(ks[4], ks[5], lin1_in, hidden)
    w2, b2 = linear(ks[6], ks[7], hidden, hidden)
    w3, b3 = linear(ks[8], ks[9], hidden, hidden)
    w4, b4 = linear(ks[10], ks[11], hidden, in_sz)

    out_pad = max(LANES, ((in_sz + LANES - 1) // LANES) * LANES)
    w4p = jnp.zeros((hidden, out_pad), jnp.float32).at[:, :in_sz].set(w4)
    b4p = jnp.zeros((1, out_pad), jnp.float32).at[:, :in_sz].set(b4)

    # nn.Embedding(n_steps, 128).weight.data.uniform_()  -> U[0, 1)
    embed = lambda k: jax.random.uniform(k, (n_steps, hidden), jnp.float32)
    bf16 = jnp.bfloat16

    return {
        # original parameters (used by the pure-JAX reference)
        "w_scene": w_scene, "b_scene": b_scene, "w_sil": w_sil, "b_sil": b_sil,
        "w1": w1, "b1": b1, "w2": w2, "b2": b2, "w3": w3, "b3": b3,
        "w4": w4, "b4": b4,
        # derived fused-kernel parameters: bf16 (single-pass MXU, half the VMEM/DMA),
        # AvgPool 1/225 folded into the head weights, lin1 split by input group.
        "ws_k": (w_scene / float(SPATIAL)).astype(bf16),
        "wb_k": (w_sil / float(SPATIAL)).astype(bf16),
        "bs": b_scene, "bb": b_sil,
        "w1x_k": w1[:in_sz].astype(bf16),
        "w1cs_k": w1[in_sz:in_sz + cond_sz_scene].astype(bf16),
        "w1cb_k": w1[in_sz + cond_sz_scene:].astype(bf16),
        "w2_k": w2.astype(bf16), "w3_k": w3.astype(bf16),
        "w4p_k": w4p.astype(bf16), "b4p": b4p,
        "embed1": embed(ks[12]), "embed2": embed(ks[13]), "embed3": embed(ks[14]),
    }


# ------------------------------ forward ------------------------------------ #

def _pick_batch_tile(B):
    """bT=16 amortizes the ~0.35us per-grid-step cost on every generation while the
    double-buffered bf16 feature DMA (~14.8 MiB) stays within v5e/v6e/v7x budgets and
    gives >=2 tiles (both v7x TensorCores busy) for B>16.  Multi-tile bT must be a
    multiple of 16 so the bf16 (bT*225, 512) feature block stays sublane-tile aligned;
    small batches run as one full-extent tile."""
    return B if B <= 16 else 16


@jax.jit
def forward(params, x, y, cond_scene_feats, cond_sil_feats):
    """Equivalent of the module's forward with idx=None.

    x:            (B, in_sz)  float32
    y:            (B,)        int32 timestep indices
    cond_*_feats: (B, 15, 15, 512) NHWC SqueezeNet-1.1 feature maps (bf16 preferred;
                  the cast lives in the frozen backbone's epilogue, not here).
    """
    B, in_sz = x.shape
    hidden = params["w2"].shape[0]
    cs = params["bs"].shape[1]
    cb = params["bb"].shape[1]
    cond_total = cs + cb
    out_pad = params["b4p"].shape[1]

    bT = _pick_batch_tile(B)
    B_pad = ((B + bT - 1) // bT) * bT
    n_tiles = B_pad // bT

    def prep_feats(f):
        # (B,15,15,512) -> (B*225, 512): a free contiguous view.  astype is a no-op
        # for bf16 inputs, so no extra HBM copy is made on the dominant feature path.
        f2 = f.reshape(B * SPATIAL, FEAT_C).astype(jnp.bfloat16)
        if B_pad > B:
            f2 = jnp.pad(f2, ((0, (B_pad - B) * SPATIAL), (0, 0)))
        return f2

    scene = prep_feats(cond_scene_feats)
    sil = prep_feats(cond_sil_feats)

    def pad_b(a):
        return jnp.pad(a, ((0, B_pad - B), (0, 0))) if B_pad > B else a

    xp = pad_b(x)
    # embedding gather (glue): gamma_k = embed_k[y]  -> (B, 128)
    g1 = pad_b(params["embed1"][y])
    g2 = pad_b(params["embed2"][y])
    g3 = pad_b(params["embed3"][y])

    # (bT, bT*225) 0/1 block-pool matrix: sel @ features == per-image spatial sums,
    # putting the AvgPool reduction on the MXU instead of the VPU.
    rows = jax.lax.broadcasted_iota(jnp.int32, (bT, bT * SPATIAL), 0)
    cols = jax.lax.broadcasted_iota(jnp.int32, (bT, bT * SPATIAL), 1)
    sel = (rows == cols // SPATIAL).astype(jnp.bfloat16)

    feat_spec = pl.BlockSpec((bT * SPATIAL, FEAT_C), lambda i: (i, 0))
    bspec = lambda w: pl.BlockSpec((bT, w), lambda i: (i, 0))
    wspec = lambda r, c: pl.BlockSpec((r, c), lambda i: (0, 0))   # resident (constant) blocks

    grid_spec = pltpu.PrefetchScalarGridSpec(
        num_scalar_prefetch=0,
        grid=(n_tiles,),
        in_specs=[
            wspec(bT, bT * SPATIAL),                               # sel (pooling matrix)
            feat_spec, feat_spec,                                  # scene / silhouette feats
            bspec(in_sz), bspec(hidden), bspec(hidden), bspec(hidden),  # x, g1..g3
            wspec(FEAT_C, cs), wspec(1, cs),                       # scene head
            wspec(FEAT_C, cb), wspec(1, cb),                       # silhouette head
            wspec(in_sz, hidden), wspec(cs, hidden), wspec(cb, hidden), wspec(1, hidden),
            wspec(hidden, hidden), wspec(1, hidden),               # lin2
            wspec(hidden, hidden), wspec(1, hidden),               # lin3
            wspec(hidden, out_pad), wspec(1, out_pad),             # lin4 (lane-padded)
        ],
        out_specs=bspec(out_pad),
    )

    flops = int(
        2 * 2 * B_pad * (bT * SPATIAL) * FEAT_C            # MXU pooling (sel @ feats), 2 heads
        + 2 * B_pad * FEAT_C * (cs + cb)                   # head matmuls
        + 2 * B_pad * (in_sz + cond_total) * hidden        # lin1 (split matmul)
        + 2 * B_pad * hidden * hidden * 2                  # lin2, lin3
        + 2 * B_pad * hidden * out_pad                     # lin4
        + 10 * B_pad * hidden * 3)                         # gating + softplus VPU work
    transcendentals = int(2 * 3 * B_pad * hidden)          # exp + log1p per softplus
    bytes_accessed = int(
        2 * B_pad * SPATIAL * FEAT_C * 2                   # bf16 feature maps (dominant)
        + B_pad * (in_sz + 3 * hidden + out_pad) * 4       # x, gammas, output
        + bT * bT * SPATIAL * 2                            # sel matrix
        + 2 * (FEAT_C * (cs + cb) + (in_sz + cond_total) * hidden
               + 2 * hidden * hidden + hidden * out_pad)   # bf16 weights
        + 4 * (cs + cb + 3 * hidden + out_pad))            # f32 biases

    out = pl.pallas_call(
        fused_forward_kernel,
        out_shape=jax.ShapeDtypeStruct((B_pad, out_pad), jnp.float32),
        grid_spec=grid_spec,
        compiler_params=pltpu.CompilerParams(
            dimension_semantics=("parallel",),
            # bT=16: ~14.8 MiB double-buffered features + weights/intermediates;
            # 48 MiB ceiling is within v7x's 64 MiB physical VMEM and leaves headroom.
            vmem_limit_bytes=48 * 1024 * 1024),
        cost_estimate=pl.CostEstimate(
            flops=flops, transcendentals=transcendentals,
            bytes_accessed=bytes_accessed),
    )(sel, scene, sil, xp, g1, g2, g3,
      params["ws_k"], params["bs"], params["wb_k"], params["bb"],
      params["w1x_k"], params["w1cs_k"], params["w1cb_k"], params["b1"],
      params["w2_k"], params["b2"], params["w3_k"], params["b3"],
      params["w4p_k"], params["b4p"])

    return out[:B, :in_sz]


# ------------------------ pure-JAX reference (check) ------------------------ #

def reference_forward(params, x, y, scene_feats, sil_feats):
    """Reference mirroring the PyTorch forward (idx=None) in f32 on the same
    (bf16-valued) backbone features; tolerances absorb the kernel's bf16 weights."""
    def head(f, w, b):
        ff = f.reshape(f.shape[0], SPATIAL, FEAT_C).astype(jnp.float32)
        return jnp.mean(ff, axis=1) @ w + b

    cond = jnp.concatenate(
        [head(scene_feats, params["w_scene"], params["b_scene"]),
         head(sil_feats, params["w_sil"], params["b_sil"])], axis=-1)

    def softplus(v):
        return jnp.where(v > 20.0, v, jnp.log1p(jnp.exp(jnp.minimum(v, 20.0))))

    g1 = params["embed1"][y]; g2 = params["embed2"][y]; g3 = params["embed3"][y]
    h = jnp.concatenate([x, cond], axis=-1)
    h = softplus(g1 * (h @ params["w1"] + params["b1"]))
    h = softplus(g2 * (h @ params["w2"] + params["b2"]))
    h = softplus(g3 * (h @ params["w3"] + params["b3"]))
    return h @ params["w4"] + params["b4"]


# --------------------------------- main ------------------------------------- #

if __name__ == "__main__":
    B = 2
    n_steps = 8
    in_sz = 16
    cond_sz_scene = 32
    cond_sz_silhouette = 32

    key = jax.random.PRNGKey(0)
    k_params, k_x, k_y, k_fs, k_fb = jax.random.split(key, 5)

    params = init_params(k_params, n_steps, in_sz, cond_sz_scene, cond_sz_silhouette)

    x = jax.random.normal(k_x, (B, in_sz), jnp.float32)
    y = jax.random.randint(k_y, (B,), 0, n_steps, jnp.int32)
    # synthetic SqueezeNet-1.1 feature maps (post-ReLU -> non-negative); the frozen
    # backbone emits bf16 NHWC, so the kernel consumes them without any extra copy.
    cond_scene_feats = jax.nn.relu(
        jax.random.normal(k_fs, (B, 15, 15, 512), jnp.float32)).astype(jnp.bfloat16)
    cond_sil_feats = jax.nn.relu(
        jax.random.normal(k_fb, (B, 15, 15, 512), jnp.float32)).astype(jnp.bfloat16)

    out = forward(params, x, y, cond_scene_feats, cond_sil_feats)
    jax.block_until_ready(out)
    assert out.shape == (B, in_sz) and out.dtype == jnp.float32

    ref = reference_forward(params, x, y, cond_scene_feats, cond_sil_feats)
    max_err = float(jnp.max(jnp.abs(out - ref)))
    assert jnp.allclose(out, ref, atol=5e-2, rtol=5e-2), f"max abs err {max_err}"

    print("KERNEL_OK")
</pallas_src>

<mosaic_0001>
module attributes {stable_mosaic.version = 11 : i64} {
  func.func @fused_forward_kernel(%arg0: i32, %arg1: memref<2x450xbf16, #tpu.memory_space<vmem>>, %arg2: memref<450x512xbf16, #tpu.memory_space<vmem>>, %arg3: memref<450x512xbf16, #tpu.memory_space<vmem>>, %arg4: memref<2x16xf32, #tpu.memory_space<vmem>>, %arg5: memref<2x128xf32, #tpu.memory_space<vmem>>, %arg6: memref<2x128xf32, #tpu.memory_space<vmem>>, %arg7: memref<2x128xf32, #tpu.memory_space<vmem>>, %arg8: memref<512x32xbf16, #tpu.memory_space<vmem>>, %arg9: memref<1x32xf32, #tpu.memory_space<vmem>>, %arg10: memref<512x32xbf16, #tpu.memory_space<vmem>>, %arg11: memref<1x32xf32, #tpu.memory_space<vmem>>, %arg12: memref<16x128xbf16, #tpu.memory_space<vmem>>, %arg13: memref<32x128xbf16, #tpu.memory_space<vmem>>, %arg14: memref<32x128xbf16, #tpu.memory_space<vmem>>, %arg15: memref<1x128xf32, #tpu.memory_space<vmem>>, %arg16: memref<128x128xbf16, #tpu.memory_space<vmem>>, %arg17: memref<1x128xf32, #tpu.memory_space<vmem>>, %arg18: memref<128x128xbf16, #tpu.memory_space<vmem>>, %arg19: memref<1x128xf32, #tpu.memory_space<vmem>>, %arg20: memref<128x128xbf16, #tpu.memory_space<vmem>>, %arg21: memref<1x128xf32, #tpu.memory_space<vmem>>, %arg22: memref<2x128xf32, #tpu.memory_space<vmem>>) attributes {dimension_semantics = [#tpu.dimension_semantics<parallel>], iteration_bounds = array<i64: 1>, scalar_prefetch = 0 : i64, scratch_operands = 0 : i64, tpu.core_type = #tpu.core_type<tc>, window_params = [{pipeline_mode = #tpu.pipeline_mode<synchronous>, transform_indices = @transform_0, window_bounds = array<i64: 2, 450>}, {transform_indices = @transform_1, window_bounds = array<i64: 450, 512>}, {transform_indices = @transform_2, window_bounds = array<i64: 450, 512>}, {transform_indices = @transform_3, window_bounds = array<i64: 2, 16>}, {transform_indices = @transform_4, window_bounds = array<i64: 2, 128>}, {transform_indices = @transform_5, window_bounds = array<i64: 2, 128>}, {transform_indices = @transform_6, window_bounds = array<i64: 2, 128>}, {pipeline_mode = #tpu.pipeline_mode<synchronous>, transform_indices = @transform_7, window_bounds = array<i64: 512, 32>}, {pipeline_mode = #tpu.pipeline_mode<synchronous>, transform_indices = @transform_8, window_bounds = array<i64: 1, 32>}, {pipeline_mode = #tpu.pipeline_mode<synchronous>, transform_indices = @transform_9, window_bounds = array<i64: 512, 32>}, {pipeline_mode = #tpu.pipeline_mode<synchronous>, transform_indices = @transform_10, window_bounds = array<i64: 1, 32>}, {pipeline_mode = #tpu.pipeline_mode<synchronous>, transform_indices = @transform_11, window_bounds = array<i64: 16, 128>}, {pipeline_mode = #tpu.pipeline_mode<synchronous>, transform_indices = @transform_12, window_bounds = array<i64: 32, 128>}, {pipeline_mode = #tpu.pipeline_mode<synchronous>, transform_indices = @transform_13, window_bounds = array<i64: 32, 128>}, {pipeline_mode = #tpu.pipeline_mode<synchronous>, transform_indices = @transform_14, window_bounds = array<i64: 1, 128>}, {pipeline_mode = #tpu.pipeline_mode<synchronous>, transform_indices = @transform_15, window_bounds = array<i64: 128, 128>}, {pipeline_mode = #tpu.pipeline_mode<synchronous>, transform_indices = @transform_16, window_bounds = array<i64: 1, 128>}, {pipeline_mode = #tpu.pipeline_mode<synchronous>, transform_indices = @transform_17, window_bounds = array<i64: 128, 128>}, {pipeline_mode = #tpu.pipeline_mode<synchronous>, transform_indices = @transform_18, window_bounds = array<i64: 1, 128>}, {pipeline_mode = #tpu.pipeline_mode<synchronous>, transform_indices = @transform_19, window_bounds = array<i64: 128, 128>}, {pipeline_mode = #tpu.pipeline_mode<synchronous>, transform_indices = @transform_20, window_bounds = array<i64: 1, 128>}, {transform_indices = @transform_21, window_bounds = array<i64: 2, 128>}]} {
    %c0 = arith.constant 0 : index
    %c0_0 = arith.constant 0 : index
    %0 = vector.load %arg1[%c0, %c0_0] : memref<2x450xbf16, #tpu.memory_space<vmem>>, vector<2x450xbf16>
    %c0_1 = arith.constant 0 : index
    %c0_2 = arith.constant 0 : index
    %1 = vector.load %arg2[%c0_1, %c0_2] : memref<450x512xbf16, #tpu.memory_space<vmem>>, vector<450x512xbf16>
    %cst = arith.constant dense<0.000000e+00> : vector<2x512xf32>
    %2 = tpu.matmul %0, %1, %cst {dimension_numbers = #tpu.dot_dimension_numbers<[1], [0], [0], [1], [0, 0, 1, 1], [], []>} : vector<2x450xbf16>, vector<450x512xbf16>, vector<2x512xf32> -> vector<2x512xf32>
    %c0_3 = arith.constant 0 : index
    %c0_4 = arith.constant 0 : index
    %3 = vector.load %arg3[%c0_3, %c0_4] : memref<450x512xbf16, #tpu.memory_space<vmem>>, vector<450x512xbf16>
    %cst_5 = arith.constant dense<0.000000e+00> : vector<2x512xf32>
    %4 = tpu.matmul %0, %3, %cst_5 {dimension_numbers = #tpu.dot_dimension_numbers<[1], [0], [0], [1], [0, 0, 1, 1], [], []>} : vector<2x450xbf16>, vector<450x512xbf16>, vector<2x512xf32> -> vector<2x512xf32>
    %5 = arith.truncf %2 : vector<2x512xf32> to vector<2x512xbf16>
    %c0_6 = arith.constant 0 : index
    %c0_7 = arith.constant 0 : index
    %6 = vector.load %arg8[%c0_6, %c0_7] : memref<512x32xbf16, #tpu.memory_space<vmem>>, vector<512x32xbf16>
    %cst_8 = arith.constant dense<0.000000e+00> : vector<2x32xf32>
    %7 = tpu.matmul %5, %6, %cst_8 {dimension_numbers = #tpu.dot_dimension_numbers<[1], [0], [0], [1], [0, 0, 1, 1], [], []>} : vector<2x512xbf16>, vector<512x32xbf16>, vector<2x32xf32> -> vector<2x32xf32>
    %c0_9 = arith.constant 0 : index
    %c0_10 = arith.constant 0 : index
    %8 = vector.load %arg9[%c0_9, %c0_10] : memref<1x32xf32, #tpu.memory_space<vmem>>, vector<1x32xf32>
    %9 = vector.broadcast %8 : vector<1x32xf32> to vector<2x32xf32>
    %10 = arith.addf %7, %9 : vector<2x32xf32>
    %11 = arith.truncf %4 : vector<2x512xf32> to vector<2x512xbf16>
    %c0_11 = arith.constant 0 : index
    %c0_12 = arith.constant 0 : index
    %12 = vector.load %arg10[%c0_11, %c0_12] : memref<512x32xbf16, #tpu.memory_space<vmem>>, vector<512x32xbf16>
    %cst_13 = arith.constant dense<0.000000e+00> : vector<2x32xf32>
    %13 = tpu.matmul %11, %12, %cst_13 {dimension_numbers = #tpu.dot_dimension_numbers<[1], [0], [0], [1], [0, 0, 1, 1], [], []>} : vector<2x512xbf16>, vector<512x32xbf16>, vector<2x32xf32> -> vector<2x32xf32>
    %c0_14 = arith.constant 0 : index
    %c0_15 = arith.constant 0 : index
    %14 = vector.load %arg11[%c0_14, %c0_15] : memref<1x32xf32, #tpu.memory_space<vmem>>, vector<1x32xf32>
    %15 = vector.broadcast %14 : vector<1x32xf32> to vector<2x32xf32>
    %16 = arith.addf %13, %15 : vector<2x32xf32>
    %c0_16 = arith.constant 0 : index
    %c0_17 = arith.constant 0 : index
    %17 = vector.load %arg4[%c0_16, %c0_17] : memref<2x16xf32, #tpu.memory_space<vmem>>, vector<2x16xf32>
    %18 = arith.truncf %17 : vector<2x16xf32> to vector<2x16xbf16>
    %c0_18 = arith.constant 0 : index
    %c0_19 = arith.constant 0 : index
    %19 = vector.load %arg12[%c0_18, %c0_19] : memref<16x128xbf16, #tpu.memory_space<vmem>>, vector<16x128xbf16>
    %cst_20 = arith.constant dense<0.000000e+00> : vector<2x128xf32>
    %20 = tpu.matmul %18, %19, %cst_20 {dimension_numbers = #tpu.dot_dimension_numbers<[1], [0], [0], [1], [0, 0, 1, 1], [], []>} : vector<2x16xbf16>, vector<16x128xbf16>, vector<2x128xf32> -> vector<2x128xf32>
    %21 = arith.truncf %10 : vector<2x32xf32> to vector<2x32xbf16>
    %c0_21 = arith.constant 0 : index
    %c0_22 = arith.constant 0 : index
    %22 = vector.load %arg13[%c0_21, %c0_22] : memref<32x128xbf16, #tpu.memory_space<vmem>>, vector<32x128xbf16>
    %cst_23 = arith.constant dense<0.000000e+00> : vector<2x128xf32>
    %23 = tpu.matmul %21, %22, %cst_23 {dimension_numbers = #tpu.dot_dimension_numbers<[1], [0], [0], [1], [0, 0, 1, 1], [], []>} : vector<2x32xbf16>, vector<32x128xbf16>, vector<2x128xf32> -> vector<2x128xf32>
    %24 = arith.addf %20, %23 : vector<2x128xf32>
    %25 = arith.truncf %16 : vector<2x32xf32> to vector<2x32xbf16>
    %c0_24 = arith.constant 0 : index
    %c0_25 = arith.constant 0 : index
    %26 = vector.load %arg14[%c0_24, %c0_25] : memref<32x128xbf16, #tpu.memory_space<vmem>>, vector<32x128xbf16>
    %cst_26 = arith.constant dense<0.000000e+00> : vector<2x128xf32>
    %27 = tpu.matmul %25, %26, %cst_26 {dimension_numbers = #tpu.dot_dimension_numbers<[1], [0], [0], [1], [0, 0, 1, 1], [], []>} : vector<2x32xbf16>, vector<32x128xbf16>, vector<2x128xf32> -> vector<2x128xf32>
    %28 = arith.addf %24, %27 : vector<2x128xf32>
    %c0_27 = arith.constant 0 : index
    %c0_28 = arith.constant 0 : index
    %29 = vector.load %arg15[%c0_27, %c0_28] : memref<1x128xf32, #tpu.memory_space<vmem>>, vector<1x128xf32>
    %30 = vector.broadcast %29 : vector<1x128xf32> to vector<2x128xf32>
    %31 = arith.addf %28, %30 : vector<2x128xf32>
    %c0_29 = arith.constant 0 : index
    %c0_30 = arith.constant 0 : index
    %32 = vector.load %arg5[%c0_29, %c0_30] : memref<2x128xf32, #tpu.memory_space<vmem>>, vector<2x128xf32>
    %33 = arith.mulf %32, %31 : vector<2x128xf32>
    %cst_31 = arith.constant 2.000000e+01 : f32
    %34 = vector.broadcast %cst_31 : f32 to vector<2x128xf32>
    %35 = arith.cmpf ogt, %33, %34 : vector<2x128xf32>
    %cst_32 = arith.constant 2.000000e+01 : f32
    %36 = vector.broadcast %cst_32 : f32 to vector<2x128xf32>
    %37 = arith.minimumf %33, %36 : vector<2x128xf32>
    %38 = math.exp %37 : vector<2x128xf32>
    %39 = math.log1p %38 : vector<2x128xf32>
    %40 = arith.select %35, %33, %39 : vector<2x128xi1>, vector<2x128xf32>
    %41 = arith.truncf %40 : vector<2x128xf32> to vector<2x128xbf16>
    %c0_33 = arith.constant 0 : index
    %c0_34 = arith.constant 0 : index
    %42 = vector.load %arg16[%c0_33, %c0_34] : memref<128x128xbf16, #tpu.memory_space<vmem>>, vector<128x128xbf16>
    %cst_35 = arith.constant dense<0.000000e+00> : vector<2x128xf32>
    %43 = tpu.matmul %41, %42, %cst_35 {dimension_numbers = #tpu.dot_dimension_numbers<[1], [0], [0], [1], [0, 0, 1, 1], [], []>} : vector<2x128xbf16>, vector<128x128xbf16>, vector<2x128xf32> -> vector<2x128xf32>
    %c0_36 = arith.constant 0 : index
    %c0_37 = arith.constant 0 : index
    %44 = vector.load %arg17[%c0_36, %c0_37] : memref<1x128xf32, #tpu.memory_space<vmem>>, vector<1x128xf32>
    %45 = vector.broadcast %44 : vector<1x128xf32> to vector<2x128xf32>
    %46 = arith.addf %43, %45 : vector<2x128xf32>
    %c0_38 = arith.constant 0 : index
    %c0_39 = arith.constant 0 : index
    %47 = vector.load %arg6[%c0_38, %c0_39] : memref<2x128xf32, #tpu.memory_space<vmem>>, vector<2x128xf32>
    %48 = arith.mulf %47, %46 : vector<2x128xf32>
    %cst_40 = arith.constant 2.000000e+01 : f32
    %49 = vector.broadcast %cst_40 : f32 to vector<2x128xf32>
    %50 = arith.cmpf ogt, %48, %49 : vector<2x128xf32>
    %cst_41 = arith.constant 2.000000e+01 : f32
    %51 = vector.broadcast %cst_41 : f32 to vector<2x128xf32>
    %52 = arith.minimumf %48, %51 : vector<2x128xf32>
    %53 = math.exp %52 : vector<2x128xf32>
    %54 = math.log1p %53 : vector<2x128xf32>
    %55 = arith.select %50, %48, %54 : vector<2x128xi1>, vector<2x128xf32>
    %56 = arith.truncf %55 : vector<2x128xf32> to vector<2x128xbf16>
    %c0_42 = arith.constant 0 : index
    %c0_43 = arith.constant 0 : index
    %57 = vector.load %arg18[%c0_42, %c0_43] : memref<128x128xbf16, #tpu.memory_space<vmem>>, vector<128x128xbf16>
    %cst_44 = arith.constant dense<0.000000e+00> : vector<2x128xf32>
    %58 = tpu.matmul %56, %57, %cst_44 {dimension_numbers = #tpu.dot_dimension_numbers<[1], [0], [0], [1], [0, 0, 1, 1], [], []>} : vector<2x128xbf16>, vector<128x128xbf16>, vector<2x128xf32> -> vector<2x128xf32>
    %c0_45 = arith.constant 0 : index
    %c0_46 = arith.constant 0 : index
    %59 = vector.load %arg19[%c0_45, %c0_46] : memref<1x128xf32, #tpu.memory_space<vmem>>, vector<1x128xf32>
    %60 = vector.broadcast %59 : vector<1x128xf32> to vector<2x128xf32>
    %61 = arith.addf %58, %60 : vector<2x128xf32>
    %c0_47 = arith.constant 0 : index
    %c0_48 = arith.constant 0 : index
    %62 = vector.load %arg7[%c0_47, %c0_48] : memref<2x128xf32, #tpu.memory_space<vmem>>, vector<2x128xf32>
    %63 = arith.mulf %62, %61 : vector<2x128xf32>
    %cst_49 = arith.constant 2.000000e+01 : f32
    %64 = vector.broadcast %cst_49 : f32 to vector<2x128xf32>
    %65 = arith.cmpf ogt, %63, %64 : vector<2x128xf32>
    %cst_50 = arith.constant 2.000000e+01 : f32
    %66 = vector.broadcast %cst_50 : f32 to vector<2x128xf32>
    %67 = arith.minimumf %63, %66 : vector<2x128xf32>
    %68 = math.exp %67 : vector<2x128xf32>
    %69 = math.log1p %68 : vector<2x128xf32>
    %70 = arith.select %65, %63, %69 : vector<2x128xi1>, vector<2x128xf32>
    %71 = arith.truncf %70 : vector<2x128xf32> to vector<2x128xbf16>
    %c0_51 = arith.constant 0 : index
    %c0_52 = arith.constant 0 : index
    %72 = vector.load %arg20[%c0_51, %c0_52] : memref<128x128xbf16, #tpu.memory_space<vmem>>, vector<128x128xbf16>
    %cst_53 = arith.constant dense<0.000000e+00> : vector<2x128xf32>
    %73 = tpu.matmul %71, %72, %cst_53 {dimension_numbers = #tpu.dot_dimension_numbers<[1], [0], [0], [1], [0, 0, 1, 1], [], []>} : vector<2x128xbf16>, vector<128x128xbf16>, vector<2x128xf32> -> vector<2x128xf32>
    %c0_54 = arith.constant 0 : index
    %c0_55 = arith.constant 0 : index
    %74 = vector.load %arg21[%c0_54, %c0_55] : memref<1x128xf32, #tpu.memory_space<vmem>>, vector<1x128xf32>
    %75 = vector.broadcast %74 : vector<1x128xf32> to vector<2x128xf32>
    %76 = arith.addf %73, %75 : vector<2x128xf32>
    %c0_56 = arith.constant 0 : index
    %c0_57 = arith.constant 0 : index
    %77 = vector.load %arg22[%c0_56, %c0_57] : memref<2x128xf32, #tpu.memory_space<vmem>>, vector<2x128xf32>
    tpu.vector_store %arg22[%c0_56, %c0_57], %76 {strides = array<i32>} : memref<2x128xf32, #tpu.memory_space<vmem>>, vector<2x128xf32>,
    return
  }
  func.func @transform_0(%arg0: i32) -> (i32, i32) {
    %c0_i32 = arith.constant 0 : i32
    %c0_i32_0 = arith.constant 0 : i32
    %c0_i32_1 = arith.constant 0 : i32
    return %c0_i32, %c0_i32_0 : i32, i32
  }
  func.func @transform_1(%arg0: i32) -> (i32, i32) {
    %c0_i32 = arith.constant 0 : i32
    %c0_i32_0 = arith.constant 0 : i32
    return %arg0, %c0_i32 : i32, i32
  }
  func.func @transform_2(%arg0: i32) -> (i32, i32) {
    %c0_i32 = arith.constant 0 : i32
    %c0_i32_0 = arith.constant 0 : i32
    return %arg0, %c0_i32 : i32, i32
  }
  func.func @transform_3(%arg0: i32) -> (i32, i32) {
    %c0_i32 = arith.constant 0 : i32
    %c0_i32_0 = arith.constant 0 : i32
    return %arg0, %c0_i32 : i32, i32
  }
  func.func @transform_4(%arg0: i32) -> (i32, i32) {
    %c0_i32 = arith.constant 0 : i32
    %c0_i32_0 = arith.constant 0 : i32
    return %arg0, %c0_i32 : i32, i32
  }
  func.func @transform_5(%arg0: i32) -> (i32, i32) {
    %c0_i32 = arith.constant 0 : i32
    %c0_i32_0 = arith.constant 0 : i32
    return %arg0, %c0_i32 : i32, i32
  }
  func.func @transform_6(%arg0: i32) -> (i32, i32) {
    %c0_i32 = arith.constant 0 : i32
    %c0_i32_0 = arith.constant 0 : i32
    return %arg0, %c0_i32 : i32, i32
  }
  func.func @transform_7(%arg0: i32) -> (i32, i32) {
    %c0_i32 = arith.constant 0 : i32
    %c0_i32_0 = arith.constant 0 : i32
    %c0_i32_1 = arith.constant 0 : i32
    return %c0_i32, %c0_i32_0 : i32, i32
  }
  func.func @transform_8(%arg0: i32) -> (i32, i32) {
    %c0_i32 = arith.constant 0 : i32
    %c0_i32_0 = arith.constant 0 : i32
    %c0_i32_1 = arith.constant 0 : i32
    return %c0_i32, %c0_i32_0 : i32, i32
  }
  func.func @transform_9(%arg0: i32) -> (i32, i32) {
    %c0_i32 = arith.constant 0 : i32
    %c0_i32_0 = arith.constant 0 : i32
    %c0_i32_1 = arith.constant 0 : i32
    return %c0_i32, %c0_i32_0 : i32, i32
  }
  func.func @transform_10(%arg0: i32) -> (i32, i32) {
    %c0_i32 = arith.constant 0 : i32
    %c0_i32_0 = arith.constant 0 : i32
    %c0_i32_1 = arith.constant 0 : i32
    return %c0_i32, %c0_i32_0 : i32, i32
  }
  func.func @transform_11(%arg0: i32) -> (i32, i32) {
    %c0_i32 = arith.constant 0 : i32
    %c0_i32_0 = arith.constant 0 : i32
    %c0_i32_1 = arith.constant 0 : i32
    return %c0_i32, %c0_i32_0 : i32, i32
  }
  func.func @transform_12(%arg0: i32) -> (i32, i32) {
    %c0_i32 = arith.constant 0 : i32
    %c0_i32_0 = arith.constant 0 : i32
    %c0_i32_1 = arith.constant 0 : i32
    return %c0_i32, %c0_i32_0 : i32, i32
  }
  func.func @transform_13(%arg0: i32) -> (i32, i32) {
    %c0_i32 = arith.constant 0 : i32
    %c0_i32_0 = arith.constant 0 : i32
    %c0_i32_1 = arith.constant 0 : i32
    return %c0_i32, %c0_i32_0 : i32, i32
  }
  func.func @transform_14(%arg0: i32) -> (i32, i32) {
    %c0_i32 = arith.constant 0 : i32
    %c0_i32_0 = arith.constant 0 : i32
    %c0_i32_1 = arith.constant 0 : i32
    return %c0_i32, %c0_i32_0 : i32, i32
  }
  func.func @transform_15(%arg0: i32) -> (i32, i32) {
    %c0_i32 = arith.constant 0 : i32
    %c0_i32_0 = arith.constant 0 : i32
    %c0_i32_1 = arith.constant 0 : i32
    return %c0_i32, %c0_i32_0 : i32, i32
  }
  func.func @transform_16(%arg0: i32) -> (i32, i32) {
    %c0_i32 = arith.constant 0 : i32
    %c0_i32_0 = arith.constant 0 : i32
    %c0_i32_1 = arith.constant 0 : i32
    return %c0_i32, %c0_i32_0 : i32, i32
  }
  func.func @transform_17(%arg0: i32) -> (i32, i32) {
    %c0_i32 = arith.constant 0 : i32
    %c0_i32_0 = arith.constant 0 : i32
    %c0_i32_1 = arith.constant 0 : i32
    return %c0_i32, %c0_i32_0 : i32, i32
  }
  func.func @transform_18(%arg0: i32) -> (i32, i32) {
    %c0_i32 = arith.constant 0 : i32
    %c0_i32_0 = arith.constant 0 : i32
    %c0_i32_1 = arith.constant 0 : i32
    return %c0_i32, %c0_i32_0 : i32, i32
  }
  func.func @transform_19(%arg0: i32) -> (i32, i32) {
    %c0_i32 = arith.constant 0 : i32
    %c0_i32_0 = arith.constant 0 : i32
    %c0_i32_1 = arith.constant 0 : i32
    return %c0_i32, %c0_i32_0 : i32, i32
  }
  func.func @transform_20(%arg0: i32) -> (i32, i32) {
    %c0_i32 = arith.constant 0 : i32
    %c0_i32_0 = arith.constant 0 : i32
    %c0_i32_1 = arith.constant 0 : i32
    return %c0_i32, %c0_i32_0 : i32, i32
  }
  func.func @transform_21(%arg0: i32) -> (i32, i32) {
    %c0_i32 = arith.constant 0 : i32
    %c0_i32_0 = arith.constant 0 : i32
    return %arg0, %c0_i32 : i32, i32
  }
}

</mosaic_0001>

<llo_original>
// kernel: forward.1
$region0: #{forward.1}
  #allocation0 [shape = 'u32[]', space=smem, size = 0x4, offset = 0x4, fixed_abs, tag = 'smem constant byte address 0x4 - core index']
  #allocation1 [shape = 'u32[72,128]{1,0:T(1,128)}', space=vmem, size = 0x9000, scoped, tag = 'internal scratch']
  %s0 = inlined_call_operand.vmem [shape: bf16[2,450], index: 0, kind: input, shape index: {}]
  %s1 = inlined_call_operand.vmem [shape: bf16[450,512], index: 1, kind: input, shape index: {}]
  %s2 = inlined_call_operand.vmem [shape: bf16[450,512], index: 2, kind: input, shape index: {}]
  %s3 = inlined_call_operand.vmem [shape: f32[2,16], index: 3, kind: input, shape index: {}]
  %s4 = inlined_call_operand.vmem [shape: f32[2,128], index: 4, kind: input, shape index: {}]
  %s5 = inlined_call_operand.vmem [shape: f32[2,128], index: 5, kind: input, shape index: {}]
  %s6 = inlined_call_operand.vmem [shape: f32[2,128], index: 6, kind: input, shape index: {}]
  %s7 = inlined_call_operand.vmem [shape: bf16[512,32], index: 7, kind: input, shape index: {}]
  %s8 = inlined_call_operand.vmem [shape: f32[1,32], index: 8, kind: input, shape index: {}]
  %s9 = inlined_call_operand.vmem [shape: bf16[512,32], index: 9, kind: input, shape index: {}]
  %s10 = inlined_call_operand.vmem [shape: f32[1,32], index: 10, kind: input, shape index: {}]
  %s11 = inlined_call_operand.vmem [shape: bf16[16,128], index: 11, kind: input, shape index: {}]
  %s12 = inlined_call_operand.vmem [shape: bf16[32,128], index: 12, kind: input, shape index: {}]
  %s13 = inlined_call_operand.vmem [shape: bf16[32,128], index: 13, kind: input, shape index: {}]
  %s14 = inlined_call_operand.vmem [shape: f32[1,128], index: 14, kind: input, shape index: {}]
  %s15 = inlined_call_operand.vmem [shape: bf16[128,128], index: 15, kind: input, shape index: {}]
  %s16 = inlined_call_operand.vmem [shape: f32[1,128], index: 16, kind: input, shape index: {}]
  %s17 = inlined_call_operand.vmem [shape: bf16[128,128], index: 17, kind: input, shape index: {}]
  %s18 = inlined_call_operand.vmem [shape: f32[1,128], index: 18, kind: input, shape index: {}]
  %s19 = inlined_call_operand.vmem [shape: bf16[128,128], index: 19, kind: input, shape index: {}]
  %s20 = inlined_call_operand.vmem [shape: f32[1,128], index: 20, kind: input, shape index: {}]
  %s21 = inlined_call_operand.hbm [shape: f32[2,128], index: 21, kind: output, shape index: {}]
  %s22 = sld [smem:[#allocation0]]
  $region94: #{forward.1} parent=0
    _
  %s24 = ssub.s32 1, %s22
  %s25 = scalar_select 0, %s24, %s22
  $region1: #{forward.1} parent=0
    #allocation2 [shape = 'u8[1024]{0}', space=vmem, size = 0x400, scoped, tag = 'output window, operand 0, single buffered']
    #allocation3 [shape = 's32[1]{0}', space=sflag, size = 0x4, scoped, tag = 'scoped memory for forward.1']
    %26 = vsyncpa [#allocation3], 0
    // Predicated region
    $region2: #{forward.1} parent=1 // pred_check
      _
    $region3: #{forward.1} parent=1 // pred_check_branch
      %28 = sbr.rel (0) target = $region5
    $region4: #{forward.1} parent=1 // pred_region
      _
    $region5: #{forward.1} parent=1 // pred_fallthru
      _
    // Predicated region
    $region6: #{forward.1} parent=1 // pred_check
      _
    $region7: #{forward.1} parent=1 // pred_check_branch
      %30 = sbr.rel (0) target = $region9
    $region8: #{forward.1} parent=1 // pred_region
      _
    $region9: #{forward.1} parent=1 // pred_fallthru
      _
    // Predicated region
    $region10: #{forward.1} parent=1 // pred_check
      _
    $region11: #{forward.1} parent=1 // pred_check_branch
      %32 = sbr.rel (0) target = $region13
    $region12: #{forward.1} parent=1 // pred_region
      _
    $region13: #{forward.1} parent=1 // pred_fallthru
      _
    // Predicated region
    $region14: #{forward.1} parent=1 // pred_check
      _
    $region15: #{forward.1} parent=1 // pred_check_branch
      %34 = sbr.rel (0) target = $region17
    $region16: #{forward.1} parent=1 // pred_region
      _
    $region17: #{forward.1} parent=1 // pred_fallthru
      _
    // Predicated region
    $region18: #{forward.1} parent=1 // pred_check
      _
    $region19: #{forward.1} parent=1 // pred_check_branch
      %36 = sbr.rel (0) target = $region21
    $region20: #{forward.1} parent=1 // pred_region
      _
    $region21: #{forward.1} parent=1 // pred_fallthru
      _
    // Predicated region
    $region22: #{forward.1} parent=1 // pred_check
      _
    $region23: #{forward.1} parent=1 // pred_check_branch
      %38 = sbr.rel (0) target = $region25
    $region24: #{forward.1} parent=1 // pred_region
      _
    $region25: #{forward.1} parent=1 // pred_fallthru
      _
    // Predicated region
    $region26: #{forward.1} parent=1 // pred_check
      _
    $region27: #{forward.1} parent=1 // pred_check_branch
      %40 = sbr.rel (0) target = $region29
    $region28: #{forward.1} parent=1 // pred_region
      _
    $region29: #{forward.1} parent=1 // pred_fallthru
      _
    // Predicated region
    $region30: #{forward.1} parent=1 // pred_check
      _
    $region31: #{forward.1} parent=1 // pred_check_branch
      %42 = sbr.rel (0) target = $region33
    $region32: #{forward.1} parent=1 // pred_region
      _
    $region33: #{forward.1} parent=1 // pred_fallthru
      _
    // Predicated region
    $region34: #{forward.1} parent=1 // pred_check
      _
    $region35: #{forward.1} parent=1 // pred_check_branch
      %44 = sbr.rel (0) target = $region37
    $region36: #{forward.1} parent=1 // pred_region
      _
    $region37: #{forward.1} parent=1 // pred_fallthru
      _
    // Predicated region
    $region38: #{forward.1} parent=1 // pred_check
      _
    $region39: #{forward.1} parent=1 // pred_check_branch
      %46 = sbr.rel (0) target = $region41
    $region40: #{forward.1} parent=1 // pred_region
      _
    $region41: #{forward.1} parent=1 // pred_fallthru
      _
    // Predicated region
    $region42: #{forward.1} parent=1 // pred_check
      _
    $region43: #{forward.1} parent=1 // pred_check_branch
      %48 = sbr.rel (0) target = $region45
    $region44: #{forward.1} parent=1 // pred_region
      _
    $region45: #{forward.1} parent=1 // pred_fallthru
      _
    // Predicated region
    $region46: #{forward.1} parent=1 // pred_check
      _
    $region47: #{forward.1} parent=1 // pred_check_branch
      %50 = sbr.rel (0) target = $region49
    $region48: #{forward.1} parent=1 // pred_region
      _
    $region49: #{forward.1} parent=1 // pred_fallthru
      _
    // Predicated region
    $region50: #{forward.1} parent=1 // pred_check
      _
    $region51: #{forward.1} parent=1 // pred_check_branch
      %52 = sbr.rel (0) target = $region53
    $region52: #{forward.1} parent=1 // pred_region
      _
    $region53: #{forward.1} parent=1 // pred_fallthru
      _
    // Predicated region
    $region54: #{forward.1} parent=1 // pred_check
      _
    $region55: #{forward.1} parent=1 // pred_check_branch
      %54 = sbr.rel (0) target = $region57
    $region56: #{forward.1} parent=1 // pred_region
      _
    $region57: #{forward.1} parent=1 // pred_fallthru
      _
    // Predicated region
    $region58: #{forward.1} parent=1 // pred_check
      _
    $region59: #{forward.1} parent=1 // pred_check_branch
      %56 = sbr.rel (0) target = $region61
    $region60: #{forward.1} parent=1 // pred_region
      _
    $region61: #{forward.1} parent=1 // pred_fallthru
      _
    // Predicated region
    $region62: #{forward.1} parent=1 // pred_check
      _
    $region63: #{forward.1} parent=1 // pred_check_branch
      %58 = sbr.rel (0) target = $region65
    $region64: #{forward.1} parent=1 // pred_region
      _
    $region65: #{forward.1} parent=1 // pred_fallthru
      _
    // Predicated region
    $region66: #{forward.1} parent=1 // pred_check
      _
    $region67: #{forward.1} parent=1 // pred_check_branch
      %60 = sbr.rel (0) target = $region69
    $region68: #{forward.1} parent=1 // pred_region
      _
    $region69: #{forward.1} parent=1 // pred_fallthru
      _
    // Predicated region
    $region70: #{forward.1} parent=1 // pred_check
      _
    $region71: #{forward.1} parent=1 // pred_check_branch
      %62 = sbr.rel (0) target = $region73
    $region72: #{forward.1} parent=1 // pred_region
      _
    $region73: #{forward.1} parent=1 // pred_fallthru
      _
    // Predicated region
    $region74: #{forward.1} parent=1 // pred_check
      _
    $region75: #{forward.1} parent=1 // pred_check_branch
      %64 = sbr.rel (0) target = $region77
    $region76: #{forward.1} parent=1 // pred_region
      _
    $region77: #{forward.1} parent=1 // pred_fallthru
      _
    // Predicated region
    $region78: #{forward.1} parent=1 // pred_check
      _
    $region79: #{forward.1} parent=1 // pred_check_branch
      %66 = sbr.rel (0) target = $region81
    $region80: #{forward.1} parent=1 // pred_region
      _
    $region81: #{forward.1} parent=1 // pred_fallthru
      _
    // Predicated region
    $region82: #{forward.1} parent=1 // pred_check
      _
    $region83: #{forward.1} parent=1 // pred_check_branch
      %68 = sbr.rel (0) target = $region85
    $region84: #{forward.1} parent=1 // pred_region
      _
    $region85: #{forward.1} parent=1 // pred_fallthru
      _
    %v70 = vld [vmem:[%s0] sm:$0xf]
    %v71 = vld [vmem:[%s1] sm:$0xff]
    %v72 = vld [vmem:[%s1 + $0x8] sm:$0xff]
    %v73 = vld [vmem:[%s1 + $0x10] sm:$0xff]
    %v74 = vld [vmem:[%s1 + $0x18] sm:$0xff]
    %v75 = vld [vmem:[%s1 + $0x20] sm:$0xff]
    %v76 = vld [vmem:[%s1 + $0x28] sm:$0xff]
    %v77 = vld [vmem:[%s1 + $0x30] sm:$0xff]
    %v78 = vld [vmem:[%s1 + $0x38] sm:$0xff]
    %v79 = vld [vmem:[%s1 + $0x40] sm:$0xff]
    %v80 = vld [vmem:[%s1 + $0x48] sm:$0xff]
    %v81 = vld [vmem:[%s1 + $0x50] sm:$0xff]
    %v82 = vld [vmem:[%s1 + $0x58] sm:$0xff]
    %v83 = vld [vmem:[%s1 + $0x60] sm:$0xff]
    %v84 = vld [vmem:[%s1 + $0x68] sm:$0xff]
    %v85 = vld [vmem:[%s1 + $0x70] sm:$0xff]
    %v86 = vld [vmem:[%s1 + $0x78] sm:$0xff]
    %v87 = vld [vmem:[%s1 + $0x80] sm:$0xff]
    %v88 = vld [vmem:[%s1 + $0x88] sm:$0xff]
    %v89 = vld [vmem:[%s1 + $0x90] sm:$0xff]
    %v90 = vld [vmem:[%s1 + $0x98] sm:$0xff]
    %v91 = vld [vmem:[%s1 + $0xa0] sm:$0xff]
    %v92 = vld [vmem:[%s1 + $0xa8] sm:$0xff]
    %v93 = vld [vmem:[%s1 + $0xb0] sm:$0xff]
    %v94 = vld [vmem:[%s1 + $0xb8] sm:$0xff]
    %v95 = vld [vmem:[%s1 + $0xc0] sm:$0xff]
    %v96 = vld [vmem:[%s1 + $0xc8] sm:$0xff]
    %v97 = vld [vmem:[%s1 + $0xd0] sm:$0xff]
    %v98 = vld [vmem:[%s1 + $0xd8] sm:$0xff]
    %v99 = vld [vmem:[%s1 + $0xe0] sm:$0xff]
    %v100 = vld [vmem:[%s1 + $0xe8] sm:$0xff]
    %v101 = vld [vmem:[%s1 + $0xf0] sm:$0xff]
    %v102 = vld [vmem:[%s1 + $0xf8] sm:$0xff]
    %v103 = vld [vmem:[%s1 + $0x100] sm:$0xff]
    %v104 = vld [vmem:[%s1 + $0x108] sm:$0xff]
    %v105 = vld [vmem:[%s1 + $0x110] sm:$0xff]
    %v106 = vld [vmem:[%s1 + $0x118] sm:$0xff]
    %v107 = vld [vmem:[%s1 + $0x120] sm:$0xff]
    %v108 = vld [vmem:[%s1 + $0x128] sm:$0xff]
    %v109 = vld [vmem:[%s1 + $0x130] sm:$0xff]
    %v110 = vld [vmem:[%s1 + $0x138] sm:$0xff]
    %v111 = vld [vmem:[%s1 + $0x140] sm:$0xff]
    %v112 = vld [vmem:[%s1 + $0x148] sm:$0xff]
    %v113 = vld [vmem:[%s1 + $0x150] sm:$0xff]
    %v114 = vld [vmem:[%s1 + $0x158] sm:$0xff]
    %v115 = vld [vmem:[%s1 + $0x160] sm:$0xff]
    %v116 = vld [vmem:[%s1 + $0x168] sm:$0xff]
    %v117 = vld [vmem:[%s1 + $0x170] sm:$0xff]
    %v118 = vld [vmem:[%s1 + $0x178] sm:$0xff]
    %v119 = vld [vmem:[%s1 + $0x180] sm:$0xff]
    %v120 = vld [vmem:[%s1 + $0x188] sm:$0xff]
    %v121 = vld [vmem:[%s1 + $0x190] sm:$0xff]
    %v122 = vld [vmem:[%s1 + $0x198] sm:$0xff]
    %v123 = vld [vmem:[%s1 + $0x1a0] sm:$0xff]
    %v124 = vld [vmem:[%s1 + $0x1a8] sm:$0xff]
    %v125 = vld [vmem:[%s1 + $0x1b0] sm:$0xff]
    %v126 = vld [vmem:[%s1 + $0x1b8] sm:$0xff]
    %v127 = vld [vmem:[%s1 + $0x1c0] sm:$0xff]
    %v128 = vld [vmem:[%s1 + $0x1c8] sm:$0xff]
    %v129 = vld [vmem:[%s1 + $0x1d0] sm:$0xff]
    %v130 = vld [vmem:[%s1 + $0x1d8] sm:$0xff]
    %v131 = vld [vmem:[%s1 + $0x1e0] sm:$0xff]
    %v132 = vld [vmem:[%s1 + $0x1e8] sm:$0xff]
    %v133 = vld [vmem:[%s1 + $0x1f0] sm:$0xff]
    %v134 = vld [vmem:[%s1 + $0x1f8] sm:$0xff]
    %v135 = vld [vmem:[%s1 + $0x200] sm:$0xff]
    %v136 = vld [vmem:[%s1 + $0x208] sm:$0xff]
    %v137 = vld [vmem:[%s1 + $0x210] sm:$0xff]
    %v138 = vld [vmem:[%s1 + $0x218] sm:$0xff]
    %v139 = vld [vmem:[%s1 + $0x220] sm:$0xff]
    %v140 = vld [vmem:[%s1 + $0x228] sm:$0xff]
    %v141 = vld [vmem:[%s1 + $0x230] sm:$0xff]
    %v142 = vld [vmem:[%s1 + $0x238] sm:$0xff]
    %v143 = vld [vmem:[%s1 + $0x240] sm:$0xff]
    %v144 = vld [vmem:[%s1 + $0x248] sm:$0xff]
    %v145 = vld [vmem:[%s1 + $0x250] sm:$0xff]
    %v146 = vld [vmem:[%s1 + $0x258] sm:$0xff]
    %v147 = vld [vmem:[%s1 + $0x260] sm:$0xff]
    %v148 = vld [vmem:[%s1 + $0x268] sm:$0xff]
    %v149 = vld [vmem:[%s1 + $0x270] sm:$0xff]
    %v150 = vld [vmem:[%s1 + $0x278] sm:$0xff]
    %v151 = vld [vmem:[%s1 + $0x280] sm:$0xff]
    %v152 = vld [vmem:[%s1 + $0x288] sm:$0xff]
    %v153 = vld [vmem:[%s1 + $0x290] sm:$0xff]
    %v154 = vld [vmem:[%s1 + $0x298] sm:$0xff]
    %v155 = vld [vmem:[%s1 + $0x2a0] sm:$0xff]
    %v156 = vld [vmem:[%s1 + $0x2a8] sm:$0xff]
    %v157 = vld [vmem:[%s1 + $0x2b0] sm:$0xff]
    %v158 = vld [vmem:[%s1 + $0x2b8] sm:$0xff]
    %v159 = vld [vmem:[%s1 + $0x2c0] sm:$0xff]
    %v160 = vld [vmem:[%s1 + $0x2c8] sm:$0xff]
    %v161 = vld [vmem:[%s1 + $0x2d0] sm:$0xff]
    %v162 = vld [vmem:[%s1 + $0x2d8] sm:$0xff]
    %v163 = vld [vmem:[%s1 + $0x2e0] sm:$0xff]
    %v164 = vld [vmem:[%s1 + $0x2e8] sm:$0xff]
    %v165 = vld [vmem:[%s1 + $0x2f0] sm:$0xff]
    %v166 = vld [vmem:[%s1 + $0x2f8] sm:$0xff]
    %v167 = vld [vmem:[%s1 + $0x300] sm:$0xff]
    %v168 = vld [vmem:[%s1 + $0x308] sm:$0xff]
    %v169 = vld [vmem:[%s1 + $0x310] sm:$0xff]
    %v170 = vld [vmem:[%s1 + $0x318] sm:$0xff]
    %v171 = vld [vmem:[%s1 + $0x320] sm:$0xff]
    %v172 = vld [vmem:[%s1 + $0x328] sm:$0xff]
    %v173 = vld [vmem:[%s1 + $0x330] sm:$0xff]
    %v174 = vld [vmem:[%s1 + $0x338] sm:$0xff]
    %v175 = vld [vmem:[%s1 + $0x340] sm:$0xff]
    %v176 = vld [vmem:[%s1 + $0x348] sm:$0xff]
    %v177 = vld [vmem:[%s1 + $0x350] sm:$0xff]
    %v178 = vld [vmem:[%s1 + $0x358] sm:$0xff]
    %v179 = vld [vmem:[%s1 + $0x360] sm:$0xff]
    %v180 = vld [vmem:[%s1 + $0x368] sm:$0xff]
    %v181 = vld [vmem:[%s1 + $0x370] sm:$0xff]
    %v182 = vld [vmem:[%s1 + $0x378] sm:$0xff]
    %v183 = vld [vmem:[%s1 + $0x380] sm:$0x11]
    %v184 = vld [vmem:[%s1 + $0x388] sm:$0x11]
    %186 = vst [vmem:[#allocation1] ss:$9 sm:$0xff] %v70
    %v187 = vld [vmem:[#allocation1] sm:$0xff]
    %v188 = vld [vmem:[#allocation1 + $0x9] sm:$0xff]
    %v189 = vld [vmem:[#allocation1 + $0x12] sm:$0xff]
    %v190 = vld [vmem:[#allocation1 + $0x1b] sm:$0xff]
    %v308 = vunpack.c.l.b16 %v71
    %v309 = vunpack.c.h.b16 %v71
    %v310 = vunpack.c.l.b16 %v72
    %v311 = vunpack.c.h.b16 %v72
    %v312 = vunpack.c.l.b16 %v73
    %v313 = vunpack.c.h.b16 %v73
    %v314 = vunpack.c.l.b16 %v74
    %v315 = vunpack.c.h.b16 %v74
    %v316 = vunpack.c.l.b16 %v75
    %v317 = vunpack.c.h.b16 %v75
    %v318 = vunpack.c.l.b16 %v76
    %v319 = vunpack.c.h.b16 %v76
    %v320 = vunpack.c.l.b16 %v77
    %v321 = vunpack.c.h.b16 %v77
    %v322 = vunpack.c.l.b16 %v78
    %v323 = vunpack.c.h.b16 %v78
    %v324 = vunpack.c.l.b16 %v79
    %v325 = vunpack.c.h.b16 %v79
    %v326 = vunpack.c.l.b16 %v80
    %v327 = vunpack.c.h.b16 %v80
    %v328 = vunpack.c.l.b16 %v81
    %v329 = vunpack.c.h.b16 %v81
    %v330 = vunpack.c.l.b16 %v82
    %v331 = vunpack.c.h.b16 %v82
    %v332 = vunpack.c.l.b16 %v83
    %v333 = vunpack.c.h.b16 %v83
    %v334 = vunpack.c.l.b16 %v84
    %v335 = vunpack.c.h.b16 %v84
    %v336 = vunpack.c.l.b16 %v85
    %v337 = vunpack.c.h.b16 %v85
    %v338 = vunpack.c.l.b16 %v86
    %v339 = vunpack.c.h.b16 %v86
    %v340 = vunpack.c.l.b16 %v87
    %v341 = vunpack.c.h.b16 %v87
    %v342 = vunpack.c.l.b16 %v88
    %v343 = vunpack.c.h.b16 %v88
    %v344 = vunpack.c.l.b16 %v89
    %v345 = vunpack.c.h.b16 %v89
    %v346 = vunpack.c.l.b16 %v90
    %v347 = vunpack.c.h.b16 %v90
    %v348 = vunpack.c.l.b16 %v91
    %v349 = vunpack.c.h.b16 %v91
    %v350 = vunpack.c.l.b16 %v92
    %v351 = vunpack.c.h.b16 %v92
    %v352 = vunpack.c.l.b16 %v93
    %v353 = vunpack.c.h.b16 %v93
    %v354 = vunpack.c.l.b16 %v94
    %v355 = vunpack.c.h.b16 %v94
    %v356 = vunpack.c.l.b16 %v95
    %v357 = vunpack.c.h.b16 %v95
    %v358 = vunpack.c.l.b16 %v96
    %v359 = vunpack.c.h.b16 %v96
    %v360 = vunpack.c.l.b16 %v97
    %v361 = vunpack.c.h.b16 %v97
    %v362 = vunpack.c.l.b16 %v98
    %v363 = vunpack.c.h.b16 %v98
    %v364 = vunpack.c.l.b16 %v99
    %v365 = vunpack.c.h.b16 %v99
    %v366 = vunpack.c.l.b16 %v100
    %v367 = vunpack.c.h.b16 %v100
    %v368 = vunpack.c.l.b16 %v101
    %v369 = vunpack.c.h.b16 %v101
    %v370 = vunpack.c.l.b16 %v102
    %v371 = vunpack.c.h.b16 %v102
    %v372 = vunpack.c.l.b16 %v103
    %v373 = vunpack.c.h.b16 %v103
    %v374 = vunpack.c.l.b16 %v104
    %v375 = vunpack.c.h.b16 %v104
    %v376 = vunpack.c.l.b16 %v105
    %v377 = vunpack.c.h.b16 %v105
    %v378 = vunpack.c.l.b16 %v106
    %v379 = vunpack.c.h.b16 %v106
    %v380 = vunpack.c.l.b16 %v107
    %v381 = vunpack.c.h.b16 %v107
    %v382 = vunpack.c.l.b16 %v108
    %v383 = vunpack.c.h.b16 %v108
    %v384 = vunpack.c.l.b16 %v109
    %v385 = vunpack.c.h.b16 %v109
    %v386 = vunpack.c.l.b16 %v110
    %v387 = vunpack.c.h.b16 %v110
    %v388 = vunpack.c.l.b16 %v111
    %v389 = vunpack.c.h.b16 %v111
    %v390 = vunpack.c.l.b16 %v112
    %v391 = vunpack.c.h.b16 %v112
    %v392 = vunpack.c.l.b16 %v113
    %v393 = vunpack.c.h.b16 %v113
    %v394 = vunpack.c.l.b16 %v114
    %v395 = vunpack.c.h.b16 %v114
    %v396 = vunpack.c.l.b16 %v115
    %v397 = vunpack.c.h.b16 %v115
    %v398 = vunpack.c.l.b16 %v116
    %v399 = vunpack.c.h.b16 %v116
    %v400 = vunpack.c.l.b16 %v117
    %v401 = vunpack.c.h.b16 %v117
    %v402 = vunpack.c.l.b16 %v118
    %v403 = vunpack.c.h.b16 %v118
    %v404 = vunpack.c.l.b16 %v119
    %v405 = vunpack.c.h.b16 %v119
    %v406 = vunpack.c.l.b16 %v120
    %v407 = vunpack.c.h.b16 %v120
    %v408 = vunpack.c.l.b16 %v121
    %v409 = vunpack.c.h.b16 %v121
    %v410 = vunpack.c.l.b16 %v122
    %v411 = vunpack.c.h.b16 %v122
    %v412 = vunpack.c.l.b16 %v123
    %v413 = vunpack.c.h.b16 %v123
    %v414 = vunpack.c.l.b16 %v124
    %v415 = vunpack.c.h.b16 %v124
    %v416 = vunpack.c.l.b16 %v125
    %v417 = vunpack.c.h.b16 %v125
    %v418 = vunpack.c.l.b16 %v126
    %v419 = vunpack.c.h.b16 %v126
    %v420 = vunpack.c.l.b16 %v127
    %v421 = vunpack.c.h.b16 %v127
    %v422 = vunpack.c.l.b16 %v128
    %v423 = vunpack.c.h.b16 %v128
    %v424 = vunpack.c.l.b16 %v129
    %v425 = vunpack.c.h.b16 %v129
    %v426 = vunpack.c.l.b16 %v130
    %v427 = vunpack.c.h.b16 %v130
    %v428 = vunpack.c.l.b16 %v131
    %v429 = vunpack.c.h.b16 %v131
    %v430 = vunpack.c.l.b16 %v132
    %v431 = vunpack.c.h.b16 %v132
    %v432 = vunpack.c.l.b16 %v133
    %v433 = vunpack.c.h.b16 %v133
    %v434 = vunpack.c.l.b16 %v134
    %v435 = vunpack.c.h.b16 %v134
    %v436 = vunpack.c.l.b16 %v135
    %v437 = vunpack.c.h.b16 %v135
    %v438 = vunpack.c.l.b16 %v136
    %v439 = vunpack.c.h.b16 %v136
    %v440 = vunpack.c.l.b16 %v137
    %v441 = vunpack.c.h.b16 %v137
    %v442 = vunpack.c.l.b16 %v138
    %v443 = vunpack.c.h.b16 %v138
    %v444 = vunpack.c.l.b16 %v139
    %v445 = vunpack.c.h.b16 %v139
    %v446 = vunpack.c.l.b16 %v140
    %v447 = vunpack.c.h.b16 %v140
    %v448 = vunpack.c.l.b16 %v141
    %v449 = vunpack.c.h.b16 %v141
    %v450 = vunpack.c.l.b16 %v142
    %v451 = vunpack.c.h.b16 %v142
    %v452 = vunpack.c.l.b16 %v143
    %v453 = vunpack.c.h.b16 %v143
    %v454 = vunpack.c.l.b16 %v144
    %v455 = vunpack.c.h.b16 %v144
    %v456 = vunpack.c.l.b16 %v145
    %v457 = vunpack.c.h.b16 %v145
    %v458 = vunpack.c.l.b16 %v146
    %v459 = vunpack.c.h.b16 %v146
    %v460 = vunpack.c.l.b16 %v147
    %v461 = vunpack.c.h.b16 %v147
    %v462 = vunpack.c.l.b16 %v148
    %v463 = vunpack.c.h.b16 %v148
    %v464 = vunpack.c.l.b16 %v149
    %v465 = vunpack.c.h.b16 %v149
    %v466 = vunpack.c.l.b16 %v150
    %v467 = vunpack.c.h.b16 %v150
    %v468 = vunpack.c.l.b16 %v151
    %v469 = vunpack.c.h.b16 %v151
    %v470 = vunpack.c.l.b16 %v152
    %v471 = vunpack.c.h.b16 %v152
    %v472 = vunpack.c.l.b16 %v153
    %v473 = vunpack.c.h.b16 %v153
    %v474 = vunpack.c.l.b16 %v154
    %v475 = vunpack.c.h.b16 %v154
    %v476 = vunpack.c.l.b16 %v155
    %v477 = vunpack.c.h.b16 %v155
    %v478 = vunpack.c.l.b16 %v156
    %v479 = vunpack.c.h.b16 %v156
    %v480 = vunpack.c.l.b16 %v157
    %v481 = vunpack.c.h.b16 %v157
    %v482 = vunpack.c.l.b16 %v158
    %v483 = vunpack.c.h.b16 %v158
    %v484 = vunpack.c.l.b16 %v159
    %v485 = vunpack.c.h.b16 %v159
    %v486 = vunpack.c.l.b16 %v160
    %v487 = vunpack.c.h.b16 %v160
    %v488 = vunpack.c.l.b16 %v161
    %v489 = vunpack.c.h.b16 %v161
    %v490 = vunpack.c.l.b16 %v162
    %v491 = vunpack.c.h.b16 %v162
    %v492 = vunpack.c.l.b16 %v163
    %v493 = vunpack.c.h.b16 %v163
    %v494 = vunpack.c.l.b16 %v164
    %v495 = vunpack.c.h.b16 %v164
    %v496 = vunpack.c.l.b16 %v165
    %v497 = vunpack.c.h.b16 %v165
    %v498 = vunpack.c.l.b16 %v166
    %v499 = vunpack.c.h.b16 %v166
    %v500 = vunpack.c.l.b16 %v167
    %v501 = vunpack.c.h.b16 %v167
    %v502 = vunpack.c.l.b16 %v168
    %v503 = vunpack.c.h.b16 %v168
    %v504 = vunpack.c.l.b16 %v169
    %v505 = vunpack.c.h.b16 %v169
    %v506 = vunpack.c.l.b16 %v170
    %v507 = vunpack.c.h.b16 %v170
    %v508 = vunpack.c.l.b16 %v171
    %v509 = vunpack.c.h.b16 %v171
    %v510 = vunpack.c.l.b16 %v172
    %v511 = vunpack.c.h.b16 %v172
    %v512 = vunpack.c.l.b16 %v173
    %v513 = vunpack.c.h.b16 %v173
    %v514 = vunpack.c.l.b16 %v174
    %v515 = vunpack.c.h.b16 %v174
    %v516 = vunpack.c.l.b16 %v175
    %v517 = vunpack.c.h.b16 %v175
    %v518 = vunpack.c.l.b16 %v176
    %v519 = vunpack.c.h.b16 %v176
    %v520 = vunpack.c.l.b16 %v177
    %v521 = vunpack.c.h.b16 %v177
    %v522 = vunpack.c.l.b16 %v178
    %v523 = vunpack.c.h.b16 %v178
    %v524 = vunpack.c.l.b16 %v179
    %v525 = vunpack.c.h.b16 %v179
    %v526 = vunpack.c.l.b16 %v180
    %v527 = vunpack.c.h.b16 %v180
    %v528 = vunpack.c.l.b16 %v181
    %v529 = vunpack.c.h.b16 %v181
    %v530 = vunpack.c.l.b16 %v182
    %v531 = vunpack.c.h.b16 %v182
    %v532 = vunpack.c.l.b16 %v183
    %v533 = vunpack.c.h.b16 %v183
    %v534 = vunpack.c.l.b16 %v184
    %v535 = vunpack.c.h.b16 %v184
    %v536 = vpack.c.b16 %v312, %v308
    %v537 = vpack.c.b16 %v313, %v309
    %v538 = vpack.c.b16 %v314, %v310
    %v539 = vpack.c.b16 %v315, %v311
    %v540 = vpack.c.b16 %v320, %v316
    %v541 = vpack.c.b16 %v321, %v317
    %v542 = vpack.c.b16 %v322, %v318
    %v543 = vpack.c.b16 %v323, %v319
    %v544 = vpack.c.b16 %v328, %v324
    %v545 = vpack.c.b16 %v329, %v325
    %v546 = vpack.c.b16 %v330, %v326
    %v547 = vpack.c.b16 %v331, %v327
    %v548 = vpack.c.b16 %v336, %v332
    %v549 = vpack.c.b16 %v337, %v333
    %v550 = vpack.c.b16 %v338, %v334
    %v551 = vpack.c.b16 %v339, %v335
    %v552 = vpack.c.b16 %v344, %v340
    %v553 = vpack.c.b16 %v345, %v341
    %v554 = vpack.c.b16 %v346, %v342
    %v555 = vpack.c.b16 %v347, %v343
    %v556 = vpack.c.b16 %v352, %v348
    %v557 = vpack.c.b16 %v353, %v349
    %v558 = vpack.c.b16 %v354, %v350
    %v559 = vpack.c.b16 %v355, %v351
    %v560 = vpack.c.b16 %v360, %v356
    %v561 = vpack.c.b16 %v361, %v357
    %v562 = vpack.c.b16 %v362, %v358
    %v563 = vpack.c.b16 %v363, %v359
    %v564 = vpack.c.b16 %v368, %v364
    %v565 = vpack.c.b16 %v369, %v365
    %v566 = vpack.c.b16 %v370, %v366
    %v567 = vpack.c.b16 %v371, %v367
    %v568 = vpack.c.b16 %v376, %v372
    %v569 = vpack.c.b16 %v377, %v373
    %v570 = vpack.c.b16 %v378, %v374
    %v571 = vpack.c.b16 %v379, %v375
    %v572 = vpack.c.b16 %v384, %v380
    %v573 = vpack.c.b16 %v385, %v381
    %v574 = vpack.c.b16 %v386, %v382
    %v575 = vpack.c.b16 %v387, %v383
    %v576 = vpack.c.b16 %v392, %v388
    %v577 = vpack.c.b16 %v393, %v389
    %v578 = vpack.c.b16 %v394, %v390
    %v579 = vpack.c.b16 %v395, %v391
    %v580 = vpack.c.b16 %v400, %v396
    %v581 = vpack.c.b16 %v401, %v397
    %v582 = vpack.c.b16 %v402, %v398
    %v583 = vpack.c.b16 %v403, %v399
    %v584 = vpack.c.b16 %v408, %v404
    %v585 = vpack.c.b16 %v409, %v405
    %v586 = vpack.c.b16 %v410, %v406
    %v587 = vpack.c.b16 %v411, %v407
    %v588 = vpack.c.b16 %v416, %v412
    %v589 = vpack.c.b16 %v417, %v413
    %v590 = vpack.c.b16 %v418, %v414
    %v591 = vpack.c.b16 %v419, %v415
    %v592 = vpack.c.b16 %v424, %v420
    %v593 = vpack.c.b16 %v425, %v421
    %v594 = vpack.c.b16 %v426, %v422
    %v595 = vpack.c.b16 %v427, %v423
    %v596 = vpack.c.b16 %v432, %v428
    %v597 = vpack.c.b16 %v433, %v429
    %v598 = vpack.c.b16 %v434, %v430
    %v599 = vpack.c.b16 %v435, %v431
    %v600 = vpack.c.b16 %v440, %v436
    %v601 = vpack.c.b16 %v441, %v437
    %v602 = vpack.c.b16 %v442, %v438
    %v603 = vpack.c.b16 %v443, %v439
    %v604 = vpack.c.b16 %v448, %v444
    %v605 = vpack.c.b16 %v449, %v445
    %v606 = vpack.c.b16 %v450, %v446
    %v607 = vpack.c.b16 %v451, %v447
    %v608 = vpack.c.b16 %v456, %v452
    %v609 = vpack.c.b16 %v457, %v453
    %v610 = vpack.c.b16 %v458, %v454
    %v611 = vpack.c.b16 %v459, %v455
    %v612 = vpack.c.b16 %v464, %v460
    %v613 = vpack.c.b16 %v465, %v461
    %v614 = vpack.c.b16 %v466, %v462
    %v615 = vpack.c.b16 %v467, %v463
    %v616 = vpack.c.b16 %v472, %v468
    %v617 = vpack.c.b16 %v473, %v469
    %v618 = vpack.c.b16 %v474, %v470
    %v619 = vpack.c.b16 %v475, %v471
    %v620 = vpack.c.b16 %v480, %v476
    %v621 = vpack.c.b16 %v481, %v477
    %v622 = vpack.c.b16 %v482, %v478
    %v623 = vpack.c.b16 %v483, %v479
    %v624 = vpack.c.b16 %v488, %v484
    %v625 = vpack.c.b16 %v489, %v485
    %v626 = vpack.c.b16 %v490, %v486
    %v627 = vpack.c.b16 %v491, %v487
    %v628 = vpack.c.b16 %v496, %v492
    %v629 = vpack.c.b16 %v497, %v493
    %v630 = vpack.c.b16 %v498, %v494
    %v631 = vpack.c.b16 %v499, %v495
    %v632 = vpack.c.b16 %v504, %v500
    %v633 = vpack.c.b16 %v505, %v501
    %v634 = vpack.c.b16 %v506, %v502
    %v635 = vpack.c.b16 %v507, %v503
    %v636 = vpack.c.b16 %v512, %v508
    %v637 = vpack.c.b16 %v513, %v509
    %v638 = vpack.c.b16 %v514, %v510
    %v639 = vpack.c.b16 %v515, %v511
    %v640 = vpack.c.b16 %v520, %v516
    %v641 = vpack.c.b16 %v521, %v517
    %v642 = vpack.c.b16 %v522, %v518
    %v643 = vpack.c.b16 %v523, %v519
    %v644 = vpack.c.b16 %v528, %v524
    %v645 = vpack.c.b16 %v529, %v525
    %v646 = vpack.c.b16 %v530, %v526
    %v647 = vpack.c.b16 %v531, %v527
    %v648 = vpack.c.b16 %v532, %v532
    %v649 = vpack.c.b16 %v533, %v533
    %v650 = vpack.c.b16 %v534, %v534
    %v651 = vpack.c.b16 %v535, %v535
    %vm764 = vcmask 539648
    %v765 = vsel %vm764, %v190, 0
    %vm767 = vcmask 1040384
    %v769 = vsel %vm767, %v648, 0
    %v772 = vsel %vm767, %v649, 0
    %v775 = vsel %vm767, %v650, 0
    %v778 = vsel %vm767, %v651, 0
    %780 = vmatpush.bf16.msra.mxu0 %v564
    %781 = vmatpush.bf16.msra.mxu0 %v560
    %782 = vmatpush.bf16.msra.mxu0 %v556
    %783 = vmatpush.bf16.msra.mxu0 %v552
    %784 = vmatpush.bf16.msra.mxu0 %v548
    %785 = vmatpush.bf16.msra.mxu0 %v544
    %786 = vmatpush.bf16.msra.mxu0 %v540
    %787 = vmatpush.bf16.msra.mxu0 %v536
    %788 = vmatmul.bf16.gmra.mxu0 %v187
    %v789 = vpop.f32.mrf.mxu0
    %v790 = vadd.f32 0.0, %v789
    %v791 = vpop.f32.mrf.mxu0
    %792 = vdwg.mxu0
    %793 = vmatpush.bf16.msra.mxu0 %v596
    %794 = vmatpush.bf16.msra.mxu0 %v592
    %795 = vmatpush.bf16.msra.mxu0 %v588
    %796 = vmatpush.bf16.msra.mxu0 %v584
    %797 = vmatpush.bf16.msra.mxu0 %v580
    %798 = vmatpush.bf16.msra.mxu0 %v576
    %799 = vmatpush.bf16.msra.mxu0 %v572
    %800 = vmatpush.bf16.msra.mxu0 %v568
    %801 = vmatmul.bf16.gmra.mxu0 %v188
    %v802 = vpop.f32.mrf.mxu0
    %v803 = vadd.f32 %v790, %v802
    %v804 = vpop.f32.mrf.mxu0
    %805 = vdwg.mxu0
    %806 = vmatpush.bf16.msra.mxu0 %v628
    %807 = vmatpush.bf16.msra.mxu0 %v624
    %808 = vmatpush.bf16.msra.mxu0 %v620
    %809 = vmatpush.bf16.msra.mxu0 %v616
    %810 = vmatpush.bf16.msra.mxu0 %v612
    %811 = vmatpush.bf16.msra.mxu0 %v608
    %812 = vmatpush.bf16.msra.mxu0 %v604
    %813 = vmatpush.bf16.msra.mxu0 %v600
    %814 = vmatmul.bf16.gmra.mxu0 %v189
    %v815 = vpop.f32.mrf.mxu0
    %v816 = vadd.f32 %v803, %v815
    %v817 = vpop.f32.mrf.mxu0
    %818 = vdwg.mxu0
    %819 = vmatpush.bf16.msra.mxu0 0
    %820 = vmatpush.bf16.msra.mxu0 0
    %821 = vmatpush.bf16.msra.mxu0 0
    %822 = vmatpush.bf16.msra.mxu0 %v769
    %823 = vmatpush.bf16.msra.mxu0 %v644
    %824 = vmatpush.bf16.msra.mxu0 %v640
    %825 = vmatpush.bf16.msra.mxu0 %v636
    %826 = vmatpush.bf16.msra.mxu0 %v632
    %827 = vmatmul.bf16.gmra.mxu0 %v765
    %v828 = vpop.f32.mrf.mxu0
    %v829 = vadd.f32 %v816, %v828
    %v830 = vpop.f32.mrf.mxu0
    %831 = vdwg.mxu0
    %832 = vmatpush.bf16.msra.mxu0 %v565
    %833 = vmatpush.bf16.msra.mxu0 %v561
    %834 = vmatpush.bf16.msra.mxu0 %v557
    %835 = vmatpush.bf16.msra.mxu0 %v553
    %836 = vmatpush.bf16.msra.mxu0 %v549
    %837 = vmatpush.bf16.msra.mxu0 %v545
    %838 = vmatpush.bf16.msra.mxu0 %v541
    %839 = vmatpush.bf16.msra.mxu0 %v537
    %840 = vmatmul.bf16.gmra.mxu0 %v187
    %v841 = vpop.f32.mrf.mxu0
    %v842 = vadd.f32 0.0, %v841
    %v843 = vpop.f32.mrf.mxu0
    %844 = vdwg.mxu0
    %845 = vmatpush.bf16.msra.mxu0 %v597
    %846 = vmatpush.bf16.msra.mxu0 %v593
    %847 = vmatpush.bf16.msra.mxu0 %v589
    %848 = vmatpush.bf16.msra.mxu0 %v585
    %849 = vmatpush.bf16.msra.mxu0 %v581
    %850 = vmatpush.bf16.msra.mxu0 %v577
    %851 = vmatpush.bf16.msra.mxu0 %v573
    %852 = vmatpush.bf16.msra.mxu0 %v569
    %853 = vmatmul.bf16.gmra.mxu0 %v188
    %v854 = vpop.f32.mrf.mxu0
    %v855 = vadd.f32 %v842, %v854
    %v856 = vpop.f32.mrf.mxu0
    %857 = vdwg.mxu0
    %858 = vmatpush.bf16.msra.mxu0 %v629
    %859 = vmatpush.bf16.msra.mxu0 %v625
    %860 = vmatpush.bf16.msra.mxu0 %v621
    %861 = vmatpush.bf16.msra.mxu0 %v617
    %862 = vmatpush.bf16.msra.mxu0 %v613
    %863 = vmatpush.bf16.msra.mxu0 %v609
    %864 = vmatpush.bf16.msra.mxu0 %v605
    %865 = vmatpush.bf16.msra.mxu0 %v601
    %866 = vmatmul.bf16.gmra.mxu0 %v189
    %v867 = vpop.f32.mrf.mxu0
    %v868 = vadd.f32 %v855, %v867
    %v869 = vpop.f32.mrf.mxu0
    %870 = vdwg.mxu0
    %871 = vmatpush.bf16.msra.mxu0 0
    %872 = vmatpush.bf16.msra.mxu0 0
    %873 = vmatpush.bf16.msra.mxu0 0
    %874 = vmatpush.bf16.msra.mxu0 %v772
    %875 = vmatpush.bf16.msra.mxu0 %v645
    %876 = vmatpush.bf16.msra.mxu0 %v641
    %877 = vmatpush.bf16.msra.mxu0 %v637
    %878 = vmatpush.bf16.msra.mxu0 %v633
    %879 = vmatmul.bf16.gmra.mxu0 %v765
    %v880 = vpop.f32.mrf.mxu0
    %v881 = vadd.f32 %v868, %v880
    %v882 = vpop.f32.mrf.mxu0
    %883 = vdwg.mxu0
    %884 = vmatpush.bf16.msra.mxu0 %v566
    %885 = vmatpush.bf16.msra.mxu0 %v562
    %886 = vmatpush.bf16.msra.mxu0 %v558
    %887 = vmatpush.bf16.msra.mxu0 %v554
    %888 = vmatpush.bf16.msra.mxu0 %v550
    %889 = vmatpush.bf16.msra.mxu0 %v546
    %890 = vmatpush.bf16.msra.mxu0 %v542
    %891 = vmatpush.bf16.msra.mxu0 %v538
    %892 = vmatmul.bf16.gmra.mxu0 %v187
    %v893 = vpop.f32.mrf.mxu0
    %v894 = vadd.f32 0.0, %v893
    %v895 = vpop.f32.mrf.mxu0
    %896 = vdwg.mxu0
    %897 = vmatpush.bf16.msra.mxu0 %v598
    %898 = vmatpush.bf16.msra.mxu0 %v594
    %899 = vmatpush.bf16.msra.mxu0 %v590
    %900 = vmatpush.bf16.msra.mxu0 %v586
    %901 = vmatpush.bf16.msra.mxu0 %v582
    %902 = vmatpush.bf16.msra.mxu0 %v578
    %903 = vmatpush.bf16.msra.mxu0 %v574
    %904 = vmatpush.bf16.msra.mxu0 %v570
    %905 = vmatmul.bf16.gmra.mxu0 %v188
    %v906 = vpop.f32.mrf.mxu0
    %v907 = vadd.f32 %v894, %v906
    %v908 = vpop.f32.mrf.mxu0
    %909 = vdwg.mxu0
    %910 = vmatpush.bf16.msra.mxu0 %v630
    %911 = vmatpush.bf16.msra.mxu0 %v626
    %912 = vmatpush.bf16.msra.mxu0 %v622
    %913 = vmatpush.bf16.msra.mxu0 %v618
    %914 = vmatpush.bf16.msra.mxu0 %v614
    %915 = vmatpush.bf16.msra.mxu0 %v610
    %916 = vmatpush.bf16.msra.mxu0 %v606
    %917 = vmatpush.bf16.msra.mxu0 %v602
    %918 = vmatmul.bf16.gmra.mxu0 %v189
    %v919 = vpop.f32.mrf.mxu0
    %v920 = vadd.f32 %v907, %v919
    %v921 = vpop.f32.mrf.mxu0
    %922 = vdwg.mxu0
    %923 = vmatpush.bf16.msra.mxu0 0
    %924 = vmatpush.bf16.msra.mxu0 0
    %925 = vmatpush.bf16.msra.mxu0 0
    %926 = vmatpush.bf16.msra.mxu0 %v775
    %927 = vmatpush.bf16.msra.mxu0 %v646
    %928 = vmatpush.bf16.msra.mxu0 %v642
    %929 = vmatpush.bf16.msra.mxu0 %v638
    %930 = vmatpush.bf16.msra.mxu0 %v634
    %931 = vmatmul.bf16.gmra.mxu0 %v765
    %v932 = vpop.f32.mrf.mxu0
    %v933 = vadd.f32 %v920, %v932
    %v934 = vpop.f32.mrf.mxu0
    %935 = vdwg.mxu0
    %936 = vmatpush.bf16.msra.mxu0 %v567
    %937 = vmatpush.bf16.msra.mxu0 %v563
    %938 = vmatpush.bf16.msra.mxu0 %v559
    %939 = vmatpush.bf16.msra.mxu0 %v555
    %940 = vmatpush.bf16.msra.mxu0 %v551
    %941 = vmatpush.bf16.msra.mxu0 %v547
    %942 = vmatpush.bf16.msra.mxu0 %v543
    %943 = vmatpush.bf16.msra.mxu0 %v539
    %944 = vmatmul.bf16.gmra.mxu0 %v187
    %v945 = vpop.f32.mrf.mxu0
    %v946 = vadd.f32 0.0, %v945
    %v947 = vpop.f32.mrf.mxu0
    %948 = vdwg.mxu0
    %949 = vmatpush.bf16.msra.mxu0 %v599
    %950 = vmatpush.bf16.msra.mxu0 %v595
    %951 = vmatpush.bf16.msra.mxu0 %v591
    %952 = vmatpush.bf16.msra.mxu0 %v587
    %953 = vmatpush.bf16.msra.mxu0 %v583
    %954 = vmatpush.bf16.msra.mxu0 %v579
    %955 = vmatpush.bf16.msra.mxu0 %v575
    %956 = vmatpush.bf16.msra.mxu0 %v571
    %957 = vmatmul.bf16.gmra.mxu0 %v188
    %v958 = vpop.f32.mrf.mxu0
    %v959 = vadd.f32 %v946, %v958
    %v960 = vpop.f32.mrf.mxu0
    %961 = vdwg.mxu0
    %962 = vmatpush.bf16.msra.mxu0 %v631
    %963 = vmatpush.bf16.msra.mxu0 %v627
    %964 = vmatpush.bf16.msra.mxu0 %v623
    %965 = vmatpush.bf16.msra.mxu0 %v619
    %966 = vmatpush.bf16.msra.mxu0 %v615
    %967 = vmatpush.bf16.msra.mxu0 %v611
    %968 = vmatpush.bf16.msra.mxu0 %v607
    %969 = vmatpush.bf16.msra.mxu0 %v603
    %970 = vmatmul.bf16.gmra.mxu0 %v189
    %v971 = vpop.f32.mrf.mxu0
    %v972 = vadd.f32 %v959, %v971
    %v973 = vpop.f32.mrf.mxu0
    %974 = vdwg.mxu0
    %975 = vmatpush.bf16.msra.mxu0 0
    %976 = vmatpush.bf16.msra.mxu0 0
    %977 = vmatpush.bf16.msra.mxu0 0
    %978 = vmatpush.bf16.msra.mxu0 %v778
    %979 = vmatpush.bf16.msra.mxu0 %v647
    %980 = vmatpush.bf16.msra.mxu0 %v643
    %981 = vmatpush.bf16.msra.mxu0 %v639
    %982 = vmatpush.bf16.msra.mxu0 %v635
    %983 = vmatmul.bf16.gmra.mxu0 %v765
    %v984 = vpop.f32.mrf.mxu0
    %v985 = vadd.f32 %v972, %v984
    %v986 = vpop.f32.mrf.mxu0
    %987 = vdwg.mxu0
    %v988 = vld [vmem:[%s2] sm:$0xff]
    %v989 = vld [vmem:[%s2 + $0x8] sm:$0xff]
    %v990 = vld [vmem:[%s2 + $0x10] sm:$0xff]
    %v991 = vld [vmem:[%s2 + $0x18] sm:$0xff]
    %v992 = vld [vmem:[%s2 + $0x20] sm:$0xff]
    %v993 = vld [vmem:[%s2 + $0x28] sm:$0xff]
    %v994 = vld [vmem:[%s2 + $0x30] sm:$0xff]
    %v995 = vld [vmem:[%s2 + $0x38] sm:$0xff]
    %v996 = vld [vmem:[%s2 + $0x40] sm:$0xff]
    %v997 = vld [vmem:[%s2 + $0x48] sm:$0xff]
    %v998 = vld [vmem:[%s2 + $0x50] sm:$0xff]
    %v999 = vld [vmem:[%s2 + $0x58] sm:$0xff]
    %v1000 = vld [vmem:[%s2 + $0x60] sm:$0xff]
    %v1001 = vld [vmem:[%s2 + $0x68] sm:$0xff]
    %v1002 = vld [vmem:[%s2 + $0x70] sm:$0xff]
    %v1003 = vld [vmem:[%s2 + $0x78] sm:$0xff]
    %v1004 = vld [vmem:[%s2 + $0x80] sm:$0xff]
    %v1005 = vld [vmem:[%s2 + $0x88] sm:$0xff]
    %v1006 = vld [vmem:[%s2 + $0x90] sm:$0xff]
    %v1007 = vld [vmem:[%s2 + $0x98] sm:$0xff]
    %v1008 = vld [vmem:[%s2 + $0xa0] sm:$0xff]
    %v1009 = vld [vmem:[%s2 + $0xa8] sm:$0xff]
    %v1010 = vld [vmem:[%s2 + $0xb0] sm:$0xff]
    %v1011 = vld [vmem:[%s2 + $0xb8] sm:$0xff]
    %v1012 = vld [vmem:[%s2 + $0xc0] sm:$0xff]
    %v1013 = vld [vmem:[%s2 + $0xc8] sm:$0xff]
    %v1014 = vld [vmem:[%s2 + $0xd0] sm:$0xff]
    %v1015 = vld [vmem:[%s2 + $0xd8] sm:$0xff]
    %v1016 = vld [vmem:[%s2 + $0xe0] sm:$0xff]
    %v1017 = vld [vmem:[%s2 + $0xe8] sm:$0xff]
    %v1018 = vld [vmem:[%s2 + $0xf0] sm:$0xff]
    %v1019 = vld [vmem:[%s2 + $0xf8] sm:$0xff]
    %v1020 = vld [vmem:[%s2 + $0x100] sm:$0xff]
    %v1021 = vld [vmem:[%s2 + $0x108] sm:$0xff]
    %v1022 = vld [vmem:[%s2 + $0x110] sm:$0xff]
    %v1023 = vld [vmem:[%s2 + $0x118] sm:$0xff]
    %v1024 = vld [vmem:[%s2 + $0x120] sm:$0xff]
    %v1025 = vld [vmem:[%s2 + $0x128] sm:$0xff]
    %v1026 = vld [vmem:[%s2 + $0x130] sm:$0xff]
    %v1027 = vld [vmem:[%s2 + $0x138] sm:$0xff]
    %v1028 = vld [vmem:[%s2 + $0x140] sm:$0xff]
    %v1029 = vld [vmem:[%s2 + $0x148] sm:$0xff]
    %v1030 = vld [vmem:[%s2 + $0x150] sm:$0xff]
    %v1031 = vld [vmem:[%s2 + $0x158] sm:$0xff]
    %v1032 = vld [vmem:[%s2 + $0x160] sm:$0xff]
    %v1033 = vld [vmem:[%s2 + $0x168] sm:$0xff]
    %v1034 = vld [vmem:[%s2 + $0x170] sm:$0xff]
    %v1035 = vld [vmem:[%s2 + $0x178] sm:$0xff]
    %v1036 = vld [vmem:[%s2 + $0x180] sm:$0xff]
    %v1037 = vld [vmem:[%s2 + $0x188] sm:$0xff]
    %v1038 = vld [vmem:[%s2 + $0x190] sm:$0xff]
    %v1039 = vld [vmem:[%s2 + $0x198] sm:$0xff]
    %v1040 = vld [vmem:[%s2 + $0x1a0] sm:$0xff]
    %v1041 = vld [vmem:[%s2 + $0x1a8] sm:$0xff]
    %v1042 = vld [vmem:[%s2 + $0x1b0] sm:$0xff]
    %v1043 = vld [vmem:[%s2 + $0x1b8] sm:$0xff]
    %v1044 = vld [vmem:[%s2 + $0x1c0] sm:$0xff]
    %v1045 = vld [vmem:[%s2 + $0x1c8] sm:$0xff]
    %v1046 = vld [vmem:[%s2 + $0x1d0] sm:$0xff]
    %v1047 = vld [vmem:[%s2 + $0x1d8] sm:$0xff]
    %v1048 = vld [vmem:[%s2 + $0x1e0] sm:$0xff]
    %v1049 = vld [vmem:[%s2 + $0x1e8] sm:$0xff]
    %v1050 = vld [vmem:[%s2 + $0x1f0] sm:$0xff]
    %v1051 = vld [vmem:[%s2 + $0x1f8] sm:$0xff]
    %v1052 = vld [vmem:[%s2 + $0x200] sm:$0xff]
    %v1053 = vld [vmem:[%s2 + $0x208] sm:$0xff]
    %v1054 = vld [vmem:[%s2 + $0x210] sm:$0xff]
    %v1055 = vld [vmem:[%s2 + $0x218] sm:$0xff]
    %v1056 = vld [vmem:[%s2 + $0x220] sm:$0xff]
    %v1057 = vld [vmem:[%s2 + $0x228] sm:$0xff]
    %v1058 = vld [vmem:[%s2 + $0x230] sm:$0xff]
    %v1059 = vld [vmem:[%s2 + $0x238] sm:$0xff]
    %v1060 = vld [vmem:[%s2 + $0x240] sm:$0xff]
    %v1061 = vld [vmem:[%s2 + $0x248] sm:$0xff]
    %v1062 = vld [vmem:[%s2 + $0x250] sm:$0xff]
    %v1063 = vld [vmem:[%s2 + $0x258] sm:$0xff]
    %v1064 = vld [vmem:[%s2 + $0x260] sm:$0xff]
    %v1065 = vld [vmem:[%s2 + $0x268] sm:$0xff]
    %v1066 = vld [vmem:[%s2 + $0x270] sm:$0xff]
    %v1067 = vld [vmem:[%s2 + $0x278] sm:$0xff]
    %v1068 = vld [vmem:[%s2 + $0x280] sm:$0xff]
    %v1069 = vld [vmem:[%s2 + $0x288] sm:$0xff]
    %v1070 = vld [vmem:[%s2 + $0x290] sm:$0xff]
    %v1071 = vld [vmem:[%s2 + $0x298] sm:$0xff]
    %v1072 = vld [vmem:[%s2 + $0x2a0] sm:$0xff]
    %v1073 = vld [vmem:[%s2 + $0x2a8] sm:$0xff]
    %v1074 = vld [vmem:[%s2 + $0x2b0] sm:$0xff]
    %v1075 = vld [vmem:[%s2 + $0x2b8] sm:$0xff]
    %v1076 = vld [vmem:[%s2 + $0x2c0] sm:$0xff]
    %v1077 = vld [vmem:[%s2 + $0x2c8] sm:$0xff]
    %v1078 = vld [vmem:[%s2 + $0x2d0] sm:$0xff]
    %v1079 = vld [vmem:[%s2 + $0x2d8] sm:$0xff]
    %v1080 = vld [vmem:[%s2 + $0x2e0] sm:$0xff]
    %v1081 = vld [vmem:[%s2 + $0x2e8] sm:$0xff]
    %v1082 = vld [vmem:[%s2 + $0x2f0] sm:$0xff]
    %v1083 = vld [vmem:[%s2 + $0x2f8] sm:$0xff]
    %v1084 = vld [vmem:[%s2 + $0x300] sm:$0xff]
    %v1085 = vld [vmem:[%s2 + $0x308] sm:$0xff]
    %v1086 = vld [vmem:[%s2 + $0x310] sm:$0xff]
    %v1087 = vld [vmem:[%s2 + $0x318] sm:$0xff]
    %v1088 = vld [vmem:[%s2 + $0x320] sm:$0xff]
    %v1089 = vld [vmem:[%s2 + $0x328] sm:$0xff]
    %v1090 = vld [vmem:[%s2 + $0x330] sm:$0xff]
    %v1091 = vld [vmem:[%s2 + $0x338] sm:$0xff]
    %v1092 = vld [vmem:[%s2 + $0x340] sm:$0xff]
    %v1093 = vld [vmem:[%s2 + $0x348] sm:$0xff]
    %v1094 = vld [vmem:[%s2 + $0x350] sm:$0xff]
    %v1095 = vld [vmem:[%s2 + $0x358] sm:$0xff]
    %v1096 = vld [vmem:[%s2 + $0x360] sm:$0xff]
    %v1097 = vld [vmem:[%s2 + $0x368] sm:$0xff]
    %v1098 = vld [vmem:[%s2 + $0x370] sm:$0xff]
    %v1099 = vld [vmem:[%s2 + $0x378] sm:$0xff]
    %v1100 = vld [vmem:[%s2 + $0x380] sm:$0x11]
    %v1101 = vld [vmem:[%s2 + $0x388] sm:$0x11]
    %1102 = vst [vmem:[#allocation1] ss:$9 sm:$0xff] %v70
    %v1103 = vld [vmem:[#allocation1] sm:$0xff]
    %v1104 = vld [vmem:[#allocation1 + $0x9] sm:$0xff]
    %v1105 = vld [vmem:[#allocation1 + $0x12] sm:$0xff]
    %v1106 = vld [vmem:[#allocation1 + $0x1b] sm:$0xff]
    %v1224 = vunpack.c.l.b16 %v988
    %v1225 = vunpack.c.h.b16 %v988
    %v1226 = vunpack.c.l.b16 %v989
    %v1227 = vunpack.c.h.b16 %v989
    %v1228 = vunpack.c.l.b16 %v990
    %v1229 = vunpack.c.h.b16 %v990
    %v1230 = vunpack.c.l.b16 %v991
    %v1231 = vunpack.c.h.b16 %v991
    %v1232 = vunpack.c.l.b16 %v992
    %v1233 = vunpack.c.h.b16 %v992
    %v1234 = vunpack.c.l.b16 %v993
    %v1235 = vunpack.c.h.b16 %v993
    %v1236 = vunpack.c.l.b16 %v994
    %v1237 = vunpack.c.h.b16 %v994
    %v1238 = vunpack.c.l.b16 %v995
    %v1239 = vunpack.c.h.b16 %v995
    %v1240 = vunpack.c.l.b16 %v996
    %v1241 = vunpack.c.h.b16 %v996
    %v1242 = vunpack.c.l.b16 %v997
    %v1243 = vunpack.c.h.b16 %v997
    %v1244 = vunpack.c.l.b16 %v998
    %v1245 = vunpack.c.h.b16 %v998
    %v1246 = vunpack.c.l.b16 %v999
    %v1247 = vunpack.c.h.b16 %v999
    %v1248 = vunpack.c.l.b16 %v1000
    %v1249 = vunpack.c.h.b16 %v1000
    %v1250 = vunpack.c.l.b16 %v1001
    %v1251 = vunpack.c.h.b16 %v1001
    %v1252 = vunpack.c.l.b16 %v1002
    %v1253 = vunpack.c.h.b16 %v1002
    %v1254 = vunpack.c.l.b16 %v1003
    %v1255 = vunpack.c.h.b16 %v1003
    %v1256 = vunpack.c.l.b16 %v1004
    %v1257 = vunpack.c.h.b16 %v1004
    %v1258 = vunpack.c.l.b16 %v1005
    %v1259 = vunpack.c.h.b16 %v1005
    %v1260 = vunpack.c.l.b16 %v1006
    %v1261 = vunpack.c.h.b16 %v1006
    %v1262 = vunpack.c.l.b16 %v1007
    %v1263 = vunpack.c.h.b16 %v1007
    %v1264 = vunpack.c.l.b16 %v1008
    %v1265 = vunpack.c.h.b16 %v1008
    %v1266 = vunpack.c.l.b16 %v1009
    %v1267 = vunpack.c.h.b16 %v1009
    %v1268 = vunpack.c.l.b16 %v1010
    %v1269 = vunpack.c.h.b16 %v1010
    %v1270 = vunpack.c.l.b16 %v1011
    %v1271 = vunpack.c.h.b16 %v1011
    %v1272 = vunpack.c.l.b16 %v1012
    %v1273 = vunpack.c.h.b16 %v1012
    %v1274 = vunpack.c.l.b16 %v1013
    %v1275 = vunpack.c.h.b16 %v1013
    %v1276 = vunpack.c.l.b16 %v1014
    %v1277 = vunpack.c.h.b16 %v1014
    %v1278 = vunpack.c.l.b16 %v1015
    %v1279 = vunpack.c.h.b16 %v1015
    %v1280 = vunpack.c.l.b16 %v1016
    %v1281 = vunpack.c.h.b16 %v1016
    %v1282 = vunpack.c.l.b16 %v1017
    %v1283 = vunpack.c.h.b16 %v1017
    %v1284 = vunpack.c.l.b16 %v1018
    %v1285 = vunpack.c.h.b16 %v1018
    %v1286 = vunpack.c.l.b16 %v1019
    %v1287 = vunpack.c.h.b16 %v1019
    %v1288 = vunpack.c.l.b16 %v1020
    %v1289 = vunpack.c.h.b16 %v1020
    %v1290 = vunpack.c.l.b16 %v1021
    %v1291 = vunpack.c.h.b16 %v1021
    %v1292 = vunpack.c.l.b16 %v1022
    %v1293 = vunpack.c.h.b16 %v1022
    %v1294 = vunpack.c.l.b16 %v1023
    %v1295 = vunpack.c.h.b16 %v1023
    %v1296 = vunpack.c.l.b16 %v1024
    %v1297 = vunpack.c.h.b16 %v1024
    %v1298 = vunpack.c.l.b16 %v1025
    %v1299 = vunpack.c.h.b16 %v1025
    %v1300 = vunpack.c.l.b16 %v1026
    %v1301 = vunpack.c.h.b16 %v1026
    %v1302 = vunpack.c.l.b16 %v1027
    %v1303 = vunpack.c.h.b16 %v1027
    %v1304 = vunpack.c.l.b16 %v1028
    %v1305 = vunpack.c.h.b16 %v1028
    %v1306 = vunpack.c.l.b16 %v1029
    %v1307 = vunpack.c.h.b16 %v1029
    %v1308 = vunpack.c.l.b16 %v1030
    %v1309 = vunpack.c.h.b16 %v1030
    %v1310 = vunpack.c.l.b16 %v1031
    %v1311 = vunpack.c.h.b16 %v1031
    %v1312 = vunpack.c.l.b16 %v1032
    %v1313 = vunpack.c.h.b16 %v1032
    %v1314 = vunpack.c.l.b16 %v1033
    %v1315 = vunpack.c.h.b16 %v1033
    %v1316 = vunpack.c.l.b16 %v1034
    %v1317 = vunpack.c.h.b16 %v1034
    %v1318 = vunpack.c.l.b16 %v1035
    %v1319 = vunpack.c.h.b16 %v1035
    %v1320 = vunpack.c.l.b16 %v1036
    %v1321 = vunpack.c.h.b16 %v1036
    %v1322 = vunpack.c.l.b16 %v1037
    %v1323 = vunpack.c.h.b16 %v1037
    %v1324 = vunpack.c.l.b16 %v1038
    %v1325 = vunpack.c.h.b16 %v1038
    %v1326 = vunpack.c.l.b16 %v1039
    %v1327 = vunpack.c.h.b16 %v1039
    %v1328 = vunpack.c.l.b16 %v1040
    %v1329 = vunpack.c.h.b16 %v1040
    %v1330 = vunpack.c.l.b16 %v1041
    %v1331 = vunpack.c.h.b16 %v1041
    %v1332 = vunpack.c.l.b16 %v1042
    %v1333 = vunpack.c.h.b16 %v1042
    %v1334 = vunpack.c.l.b16 %v1043
    %v1335 = vunpack.c.h.b16 %v1043
    %v1336 = vunpack.c.l.b16 %v1044
    %v1337 = vunpack.c.h.b16 %v1044
    %v1338 = vunpack.c.l.b16 %v1045
    %v1339 = vunpack.c.h.b16 %v1045
    %v1340 = vunpack.c.l.b16 %v1046
    %v1341 = vunpack.c.h.b16 %v1046
    %v1342 = vunpack.c.l.b16 %v1047
    %v1343 = vunpack.c.h.b16 %v1047
    %v1344 = vunpack.c.l.b16 %v1048
    %v1345 = vunpack.c.h.b16 %v1048
    %v1346 = vunpack.c.l.b16 %v1049
    %v1347 = vunpack.c.h.b16 %v1049
    %v1348 = vunpack.c.l.b16 %v1050
    %v1349 = vunpack.c.h.b16 %v1050
    %v1350 = vunpack.c.l.b16 %v1051
    %v1351 = vunpack.c.h.b16 %v1051
    %v1352 = vunpack.c.l.b16 %v1052
    %v1353 = vunpack.c.h.b16 %v1052
    %v1354 = vunpack.c.l.b16 %v1053
    %v1355 = vunpack.c.h.b16 %v1053
    %v1356 = vunpack.c.l.b16 %v1054
    %v1357 = vunpack.c.h.b16 %v1054
    %v1358 = vunpack.c.l.b16 %v1055
    %v1359 = vunpack.c.h.b16 %v1055
    %v1360 = vunpack.c.l.b16 %v1056
    %v1361 = vunpack.c.h.b16 %v1056
    %v1362 = vunpack.c.l.b16 %v1057
    %v1363 = vunpack.c.h.b16 %v1057
    %v1364 = vunpack.c.l.b16 %v1058
    %v1365 = vunpack.c.h.b16 %v1058
    %v1366 = vunpack.c.l.b16 %v1059
    %v1367 = vunpack.c.h.b16 %v1059
    %v1368 = vunpack.c.l.b16 %v1060
    %v1369 = vunpack.c.h.b16 %v1060
    %v1370 = vunpack.c.l.b16 %v1061
    %v1371 = vunpack.c.h.b16 %v1061
    %v1372 = vunpack.c.l.b16 %v1062
    %v1373 = vunpack.c.h.b16 %v1062
    %v1374 = vunpack.c.l.b16 %v1063
    %v1375 = vunpack.c.h.b16 %v1063
    %v1376 = vunpack.c.l.b16 %v1064
    %v1377 = vunpack.c.h.b16 %v1064
    %v1378 = vunpack.c.l.b16 %v1065
    %v1379 = vunpack.c.h.b16 %v1065
    %v1380 = vunpack.c.l.b16 %v1066
    %v1381 = vunpack.c.h.b16 %v1066
    %v1382 = vunpack.c.l.b16 %v1067
    %v1383 = vunpack.c.h.b16 %v1067
    %v1384 = vunpack.c.l.b16 %v1068
    %v1385 = vunpack.c.h.b16 %v1068
    %v1386 = vunpack.c.l.b16 %v1069
    %v1387 = vunpack.c.h.b16 %v1069
    %v1388 = vunpack.c.l.b16 %v1070
    %v1389 = vunpack.c.h.b16 %v1070
    %v1390 = vunpack.c.l.b16 %v1071
    %v1391 = vunpack.c.h.b16 %v1071
    %v1392 = vunpack.c.l.b16 %v1072
    %v1393 = vunpack.c.h.b16 %v1072
    %v1394 = vunpack.c.l.b16 %v1073
    %v1395 = vunpack.c.h.b16 %v1073
    %v1396 = vunpack.c.l.b16 %v1074
    %v1397 = vunpack.c.h.b16 %v1074
    %v1398 = vunpack.c.l.b16 %v1075
    %v1399 = vunpack.c.h.b16 %v1075
    %v1400 = vunpack.c.l.b16 %v1076
    %v1401 = vunpack.c.h.b16 %v1076
    %v1402 = vunpack.c.l.b16 %v1077
    %v1403 = vunpack.c.h.b16 %v1077
    %v1404 = vunpack.c.l.b16 %v1078
    %v1405 = vunpack.c.h.b16 %v1078
    %v1406 = vunpack.c.l.b16 %v1079
    %v1407 = vunpack.c.h.b16 %v1079
    %v1408 = vunpack.c.l.b16 %v1080
    %v1409 = vunpack.c.h.b16 %v1080
    %v1410 = vunpack.c.l.b16 %v1081
    %v1411 = vunpack.c.h.b16 %v1081
    %v1412 = vunpack.c.l.b16 %v1082
    %v1413 = vunpack.c.h.b16 %v1082
    %v1414 = vunpack.c.l.b16 %v1083
    %v1415 = vunpack.c.h.b16 %v1083
    %v1416 = vunpack.c.l.b16 %v1084
    %v1417 = vunpack.c.h.b16 %v1084
    %v1418 = vunpack.c.l.b16 %v1085
    %v1419 = vunpack.c.h.b16 %v1085
    %v1420 = vunpack.c.l.b16 %v1086
    %v1421 = vunpack.c.h.b16 %v1086
    %v1422 = vunpack.c.l.b16 %v1087
    %v1423 = vunpack.c.h.b16 %v1087
    %v1424 = vunpack.c.l.b16 %v1088
    %v1425 = vunpack.c.h.b16 %v1088
    %v1426 = vunpack.c.l.b16 %v1089
    %v1427 = vunpack.c.h.b16 %v1089
    %v1428 = vunpack.c.l.b16 %v1090
    %v1429 = vunpack.c.h.b16 %v1090
    %v1430 = vunpack.c.l.b16 %v1091
    %v1431 = vunpack.c.h.b16 %v1091
    %v1432 = vunpack.c.l.b16 %v1092
    %v1433 = vunpack.c.h.b16 %v1092
    %v1434 = vunpack.c.l.b16 %v1093
    %v1435 = vunpack.c.h.b16 %v1093
    %v1436 = vunpack.c.l.b16 %v1094
    %v1437 = vunpack.c.h.b16 %v1094
    %v1438 = vunpack.c.l.b16 %v1095
    %v1439 = vunpack.c.h.b16 %v1095
    %v1440 = vunpack.c.l.b16 %v1096
    %v1441 = vunpack.c.h.b16 %v1096
    %v1442 = vunpack.c.l.b16 %v1097
    %v1443 = vunpack.c.h.b16 %v1097
    %v1444 = vunpack.c.l.b16 %v1098
    %v1445 = vunpack.c.h.b16 %v1098
    %v1446 = vunpack.c.l.b16 %v1099
    %v1447 = vunpack.c.h.b16 %v1099
    %v1448 = vunpack.c.l.b16 %v1100
    %v1449 = vunpack.c.h.b16 %v1100
    %v1450 = vunpack.c.l.b16 %v1101
    %v1451 = vunpack.c.h.b16 %v1101
    %v1452 = vpack.c.b16 %v1228, %v1224
    %v1453 = vpack.c.b16 %v1229, %v1225
    %v1454 = vpack.c.b16 %v1230, %v1226
    %v1455 = vpack.c.b16 %v1231, %v1227
    %v1456 = vpack.c.b16 %v1236, %v1232
    %v1457 = vpack.c.b16 %v1237, %v1233
    %v1458 = vpack.c.b16 %v1238, %v1234
    %v1459 = vpack.c.b16 %v1239, %v1235
    %v1460 = vpack.c.b16 %v1244, %v1240
    %v1461 = vpack.c.b16 %v1245, %v1241
    %v1462 = vpack.c.b16 %v1246, %v1242
    %v1463 = vpack.c.b16 %v1247, %v1243
    %v1464 = vpack.c.b16 %v1252, %v1248
    %v1465 = vpack.c.b16 %v1253, %v1249
    %v1466 = vpack.c.b16 %v1254, %v1250
    %v1467 = vpack.c.b16 %v1255, %v1251
    %v1468 = vpack.c.b16 %v1260, %v1256
    %v1469 = vpack.c.b16 %v1261, %v1257
    %v1470 = vpack.c.b16 %v1262, %v1258
    %v1471 = vpack.c.b16 %v1263, %v1259
    %v1472 = vpack.c.b16 %v1268, %v1264
    %v1473 = vpack.c.b16 %v1269, %v1265
    %v1474 = vpack.c.b16 %v1270, %v1266
    %v1475 = vpack.c.b16 %v1271, %v1267
    %v1476 = vpack.c.b16 %v1276, %v1272
    %v1477 = vpack.c.b16 %v1277, %v1273
    %v1478 = vpack.c.b16 %v1278, %v1274
    %v1479 = vpack.c.b16 %v1279, %v1275
    %v1480 = vpack.c.b16 %v1284, %v1280
    %v1481 = vpack.c.b16 %v1285, %v1281
    %v1482 = vpack.c.b16 %v1286, %v1282
    %v1483 = vpack.c.b16 %v1287, %v1283
    %v1484 = vpack.c.b16 %v1292, %v1288
    %v1485 = vpack.c.b16 %v1293, %v1289
    %v1486 = vpack.c.b16 %v1294, %v1290
    %v1487 = vpack.c.b16 %v1295, %v1291
    %v1488 = vpack.c.b16 %v1300, %v1296
    %v1489 = vpack.c.b16 %v1301, %v1297
    %v1490 = vpack.c.b16 %v1302, %v1298
    %v1491 = vpack.c.b16 %v1303, %v1299
    %v1492 = vpack.c.b16 %v1308, %v1304
    %v1493 = vpack.c.b16 %v1309, %v1305
    %v1494 = vpack.c.b16 %v1310, %v1306
    %v1495 = vpack.c.b16 %v1311, %v1307
    %v1496 = vpack.c.b16 %v1316, %v1312
    %v1497 = vpack.c.b16 %v1317, %v1313
    %v1498 = vpack.c.b16 %v1318, %v1314
    %v1499 = vpack.c.b16 %v1319, %v1315
    %v1500 = vpack.c.b16 %v1324, %v1320
    %v1501 = vpack.c.b16 %v1325, %v1321
    %v1502 = vpack.c.b16 %v1326, %v1322
    %v1503 = vpack.c.b16 %v1327, %v1323
    %v1504 = vpack.c.b16 %v1332, %v1328
    %v1505 = vpack.c.b16 %v1333, %v1329
    %v1506 = vpack.c.b16 %v1334, %v1330
    %v1507 = vpack.c.b16 %v1335, %v1331
    %v1508 = vpack.c.b16 %v1340, %v1336
    %v1509 = vpack.c.b16 %v1341, %v1337
    %v1510 = vpack.c.b16 %v1342, %v1338
    %v1511 = vpack.c.b16 %v1343, %v1339
    %v1512 = vpack.c.b16 %v1348, %v1344
    %v1513 = vpack.c.b16 %v1349, %v1345
    %v1514 = vpack.c.b16 %v1350, %v1346
    %v1515 = vpack.c.b16 %v1351, %v1347
    %v1516 = vpack.c.b16 %v1356, %v1352
    %v1517 = vpack.c.b16 %v1357, %v1353
    %v1518 = vpack.c.b16 %v1358, %v1354
    %v1519 = vpack.c.b16 %v1359, %v1355
    %v1520 = vpack.c.b16 %v1364, %v1360
    %v1521 = vpack.c.b16 %v1365, %v1361
    %v1522 = vpack.c.b16 %v1366, %v1362
    %v1523 = vpack.c.b16 %v1367, %v1363
    %v1524 = vpack.c.b16 %v1372, %v1368
    %v1525 = vpack.c.b16 %v1373, %v1369
    %v1526 = vpack.c.b16 %v1374, %v1370
    %v1527 = vpack.c.b16 %v1375, %v1371
    %v1528 = vpack.c.b16 %v1380, %v1376
    %v1529 = vpack.c.b16 %v1381, %v1377
    %v1530 = vpack.c.b16 %v1382, %v1378
    %v1531 = vpack.c.b16 %v1383, %v1379
    %v1532 = vpack.c.b16 %v1388, %v1384
    %v1533 = vpack.c.b16 %v1389, %v1385
    %v1534 = vpack.c.b16 %v1390, %v1386
    %v1535 = vpack.c.b16 %v1391, %v1387
    %v1536 = vpack.c.b16 %v1396, %v1392
    %v1537 = vpack.c.b16 %v1397, %v1393
    %v1538 = vpack.c.b16 %v1398, %v1394
    %v1539 = vpack.c.b16 %v1399, %v1395
    %v1540 = vpack.c.b16 %v1404, %v1400
    %v1541 = vpack.c.b16 %v1405, %v1401
    %v1542 = vpack.c.b16 %v1406, %v1402
    %v1543 = vpack.c.b16 %v1407, %v1403
    %v1544 = vpack.c.b16 %v1412, %v1408
    %v1545 = vpack.c.b16 %v1413, %v1409
    %v1546 = vpack.c.b16 %v1414, %v1410
    %v1547 = vpack.c.b16 %v1415, %v1411
    %v1548 = vpack.c.b16 %v1420, %v1416
    %v1549 = vpack.c.b16 %v1421, %v1417
    %v1550 = vpack.c.b16 %v1422, %v1418
    %v1551 = vpack.c.b16 %v1423, %v1419
    %v1552 = vpack.c.b16 %v1428, %v1424
    %v1553 = vpack.c.b16 %v1429, %v1425
    %v1554 = vpack.c.b16 %v1430, %v1426
    %v1555 = vpack.c.b16 %v1431, %v1427
    %v1556 = vpack.c.b16 %v1436, %v1432
    %v1557 = vpack.c.b16 %v1437, %v1433
    %v1558 = vpack.c.b16 %v1438, %v1434
    %v1559 = vpack.c.b16 %v1439, %v1435
    %v1560 = vpack.c.b16 %v1444, %v1440
    %v1561 = vpack.c.b16 %v1445, %v1441
    %v1562 = vpack.c.b16 %v1446, %v1442
    %v1563 = vpack.c.b16 %v1447, %v1443
    %v1564 = vpack.c.b16 %v1448, %v1448
    %v1565 = vpack.c.b16 %v1449, %v1449
    %v1566 = vpack.c.b16 %v1450, %v1450
    %v1567 = vpack.c.b16 %v1451, %v1451
    %v1680 = vsel %vm764, %v1106, 0
    %v1683 = vsel %vm767, %v1564, 0
    %v1686 = vsel %vm767, %v1565, 0
    %v1689 = vsel %vm767, %v1566, 0
    %v1692 = vsel %vm767, %v1567, 0
    %1694 = vmatpush.bf16.msra.mxu0 %v1480
    %1695 = vmatpush.bf16.msra.mxu0 %v1476
    %1696 = vmatpush.bf16.msra.mxu0 %v1472
    %1697 = vmatpush.bf16.msra.mxu0 %v1468
    %1698 = vmatpush.bf16.msra.mxu0 %v1464
    %1699 = vmatpush.bf16.msra.mxu0 %v1460
    %1700 = vmatpush.bf16.msra.mxu0 %v1456
    %1701 = vmatpush.bf16.msra.mxu0 %v1452
    %1702 = vmatmul.bf16.gmra.mxu0 %v1103
    %v1703 = vpop.f32.mrf.mxu0
    %v1704 = vadd.f32 0.0, %v1703
    %v1705 = vpop.f32.mrf.mxu0
    %1706 = vdwg.mxu0
    %1707 = vmatpush.bf16.msra.mxu0 %v1512
    %1708 = vmatpush.bf16.msra.mxu0 %v1508
    %1709 = vmatpush.bf16.msra.mxu0 %v1504
    %1710 = vmatpush.bf16.msra.mxu0 %v1500
    %1711 = vmatpush.bf16.msra.mxu0 %v1496
    %1712 = vmatpush.bf16.msra.mxu0 %v1492
    %1713 = vmatpush.bf16.msra.mxu0 %v1488
    %1714 = vmatpush.bf16.msra.mxu0 %v1484
    %1715 = vmatmul.bf16.gmra.mxu0 %v1104
    %v1716 = vpop.f32.mrf.mxu0
    %v1717 = vadd.f32 %v1704, %v1716
    %v1718 = vpop.f32.mrf.mxu0
    %1719 = vdwg.mxu0
    %1720 = vmatpush.bf16.msra.mxu0 %v1544
    %1721 = vmatpush.bf16.msra.mxu0 %v1540
    %1722 = vmatpush.bf16.msra.mxu0 %v1536
    %1723 = vmatpush.bf16.msra.mxu0 %v1532
    %1724 = vmatpush.bf16.msra.mxu0 %v1528
    %1725 = vmatpush.bf16.msra.mxu0 %v1524
    %1726 = vmatpush.bf16.msra.mxu0 %v1520
    %1727 = vmatpush.bf16.msra.mxu0 %v1516
    %1728 = vmatmul.bf16.gmra.mxu0 %v1105
    %v1729 = vpop.f32.mrf.mxu0
    %v1730 = vadd.f32 %v1717, %v1729
    %v1731 = vpop.f32.mrf.mxu0
    %1732 = vdwg.mxu0
    %1733 = vmatpush.bf16.msra.mxu0 0
    %1734 = vmatpush.bf16.msra.mxu0 0
    %1735 = vmatpush.bf16.msra.mxu0 0
    %1736 = vmatpush.bf16.msra.mxu0 %v1683
    %1737 = vmatpush.bf16.msra.mxu0 %v1560
    %1738 = vmatpush.bf16.msra.mxu0 %v1556
    %1739 = vmatpush.bf16.msra.mxu0 %v1552
    %1740 = vmatpush.bf16.msra.mxu0 %v1548
    %1741 = vmatmul.bf16.gmra.mxu0 %v1680
    %v1742 = vpop.f32.mrf.mxu0
    %v1743 = vadd.f32 %v1730, %v1742
    %v1744 = vpop.f32.mrf.mxu0
    %1745 = vdwg.mxu0
    %1746 = vmatpush.bf16.msra.mxu0 %v1481
    %1747 = vmatpush.bf16.msra.mxu0 %v1477
    %1748 = vmatpush.bf16.msra.mxu0 %v1473
    %1749 = vmatpush.bf16.msra.mxu0 %v1469
    %1750 = vmatpush.bf16.msra.mxu0 %v1465
    %1751 = vmatpush.bf16.msra.mxu0 %v1461
    %1752 = vmatpush.bf16.msra.mxu0 %v1457
    %1753 = vmatpush.bf16.msra.mxu0 %v1453
    %1754 = vmatmul.bf16.gmra.mxu0 %v1103
    %v1755 = vpop.f32.mrf.mxu0
    %v1756 = vadd.f32 0.0, %v1755
    %v1757 = vpop.f32.mrf.mxu0
    %1758 = vdwg.mxu0
    %1759 = vmatpush.bf16.msra.mxu0 %v1513
    %1760 = vmatpush.bf16.msra.mxu0 %v1509
    %1761 = vmatpush.bf16.msra.mxu0 %v1505
    %1762 = vmatpush.bf16.msra.mxu0 %v1501
    %1763 = vmatpush.bf16.msra.mxu0 %v1497
    %1764 = vmatpush.bf16.msra.mxu0 %v1493
    %1765 = vmatpush.bf16.msra.mxu0 %v1489
    %1766 = vmatpush.bf16.msra.mxu0 %v1485
    %1767 = vmatmul.bf16.gmra.mxu0 %v1104
    %v1768 = vpop.f32.mrf.mxu0
    %v1769 = vadd.f32 %v1756, %v1768
    %v1770 = vpop.f32.mrf.mxu0
    %1771 = vdwg.mxu0
    %1772 = vmatpush.bf16.msra.mxu0 %v1545
    %1773 = vmatpush.bf16.msra.mxu0 %v1541
    %1774 = vmatpush.bf16.msra.mxu0 %v1537
    %1775 = vmatpush.bf16.msra.mxu0 %v1533
    %1776 = vmatpush.bf16.msra.mxu0 %v1529
    %1777 = vmatpush.bf16.msra.mxu0 %v1525
    %1778 = vmatpush.bf16.msra.mxu0 %v1521
    %1779 = vmatpush.bf16.msra.mxu0 %v1517
    %1780 = vmatmul.bf16.gmra.mxu0 %v1105
    %v1781 = vpop.f32.mrf.mxu0
    %v1782 = vadd.f32 %v1769, %v1781
    %v1783 = vpop.f32.mrf.mxu0
    %1784 = vdwg.mxu0
    %1785 = vmatpush.bf16.msra.mxu0 0
    %1786 = vmatpush.bf16.msra.mxu0 0
    %1787 = vmatpush.bf16.msra.mxu0 0
    %1788 = vmatpush.bf16.msra.mxu0 %v1686
    %1789 = vmatpush.bf16.msra.mxu0 %v1561
    %1790 = vmatpush.bf16.msra.mxu0 %v1557
    %1791 = vmatpush.bf16.msra.mxu0 %v1553
    %1792 = vmatpush.bf16.msra.mxu0 %v1549
    %1793 = vmatmul.bf16.gmra.mxu0 %v1680
    %v1794 = vpop.f32.mrf.mxu0
    %v1795 = vadd.f32 %v1782, %v1794
    %v1796 = vpop.f32.mrf.mxu0
    %1797 = vdwg.mxu0
    %1798 = vmatpush.bf16.msra.mxu0 %v1482
    %1799 = vmatpush.bf16.msra.mxu0 %v1478
    %1800 = vmatpush.bf16.msra.mxu0 %v1474
    %1801 = vmatpush.bf16.msra.mxu0 %v1470
    %1802 = vmatpush.bf16.msra.mxu0 %v1466
    %1803 = vmatpush.bf16.msra.mxu0 %v1462
    %1804 = vmatpush.bf16.msra.mxu0 %v1458
    %1805 = vmatpush.bf16.msra.mxu0 %v1454
    %1806 = vmatmul.bf16.gmra.mxu0 %v1103
    %v1807 = vpop.f32.mrf.mxu0
    %v1808 = vadd.f32 0.0, %v1807
    %v1809 = vpop.f32.mrf.mxu0
    %1810 = vdwg.mxu0
    %1811 = vmatpush.bf16.msra.mxu0 %v1514
    %1812 = vmatpush.bf16.msra.mxu0 %v1510
    %1813 = vmatpush.bf16.msra.mxu0 %v1506
    %1814 = vmatpush.bf16.msra.mxu0 %v1502
    %1815 = vmatpush.bf16.msra.mxu0 %v1498
    %1816 = vmatpush.bf16.msra.mxu0 %v1494
    %1817 = vmatpush.bf16.msra.mxu0 %v1490
    %1818 = vmatpush.bf16.msra.mxu0 %v1486
    %1819 = vmatmul.bf16.gmra.mxu0 %v1104
    %v1820 = vpop.f32.mrf.mxu0
    %v1821 = vadd.f32 %v1808, %v1820
    %v1822 = vpop.f32.mrf.mxu0
    %1823 = vdwg.mxu0
    %1824 = vmatpush.bf16.msra.mxu0 %v1546
    %1825 = vmatpush.bf16.msra.mxu0 %v1542
    %1826 = vmatpush.bf16.msra.mxu0 %v1538
    %1827 = vmatpush.bf16.msra.mxu0 %v1534
    %1828 = vmatpush.bf16.msra.mxu0 %v1530
    %1829 = vmatpush.bf16.msra.mxu0 %v1526
    %1830 = vmatpush.bf16.msra.mxu0 %v1522
    %1831 = vmatpush.bf16.msra.mxu0 %v1518
    %1832 = vmatmul.bf16.gmra.mxu0 %v1105
    %v1833 = vpop.f32.mrf.mxu0
    %v1834 = vadd.f32 %v1821, %v1833
    %v1835 = vpop.f32.mrf.mxu0
    %1836 = vdwg.mxu0
    %1837 = vmatpush.bf16.msra.mxu0 0
    %1838 = vmatpush.bf16.msra.mxu0 0
    %1839 = vmatpush.bf16.msra.mxu0 0
    %1840 = vmatpush.bf16.msra.mxu0 %v1689
    %1841 = vmatpush.bf16.msra.mxu0 %v1562
    %1842 = vmatpush.bf16.msra.mxu0 %v1558
    %1843 = vmatpush.bf16.msra.mxu0 %v1554
    %1844 = vmatpush.bf16.msra.mxu0 %v1550
    %1845 = vmatmul.bf16.gmra.mxu0 %v1680
    %v1846 = vpop.f32.mrf.mxu0
    %v1847 = vadd.f32 %v1834, %v1846
    %v1848 = vpop.f32.mrf.mxu0
    %1849 = vdwg.mxu0
    %1850 = vmatpush.bf16.msra.mxu0 %v1483
    %1851 = vmatpush.bf16.msra.mxu0 %v1479
    %1852 = vmatpush.bf16.msra.mxu0 %v1475
    %1853 = vmatpush.bf16.msra.mxu0 %v1471
    %1854 = vmatpush.bf16.msra.mxu0 %v1467
    %1855 = vmatpush.bf16.msra.mxu0 %v1463
    %1856 = vmatpush.bf16.msra.mxu0 %v1459
    %1857 = vmatpush.bf16.msra.mxu0 %v1455
    %1858 = vmatmul.bf16.gmra.mxu0 %v1103
    %v1859 = vpop.f32.mrf.mxu0
    %v1860 = vadd.f32 0.0, %v1859
    %v1861 = vpop.f32.mrf.mxu0
    %1862 = vdwg.mxu0
    %1863 = vmatpush.bf16.msra.mxu0 %v1515
    %1864 = vmatpush.bf16.msra.mxu0 %v1511
    %1865 = vmatpush.bf16.msra.mxu0 %v1507
    %1866 = vmatpush.bf16.msra.mxu0 %v1503
    %1867 = vmatpush.bf16.msra.mxu0 %v1499
    %1868 = vmatpush.bf16.msra.mxu0 %v1495
    %1869 = vmatpush.bf16.msra.mxu0 %v1491
    %1870 = vmatpush.bf16.msra.mxu0 %v1487
    %1871 = vmatmul.bf16.gmra.mxu0 %v1104
    %v1872 = vpop.f32.mrf.mxu0
    %v1873 = vadd.f32 %v1860, %v1872
    %v1874 = vpop.f32.mrf.mxu0
    %1875 = vdwg.mxu0
    %1876 = vmatpush.bf16.msra.mxu0 %v1547
    %1877 = vmatpush.bf16.msra.mxu0 %v1543
    %1878 = vmatpush.bf16.msra.mxu0 %v1539
    %1879 = vmatpush.bf16.msra.mxu0 %v1535
    %1880 = vmatpush.bf16.msra.mxu0 %v1531
    %1881 = vmatpush.bf16.msra.mxu0 %v1527
    %1882 = vmatpush.bf16.msra.mxu0 %v1523
    %1883 = vmatpush.bf16.msra.mxu0 %v1519
    %1884 = vmatmul.bf16.gmra.mxu0 %v1105
    %v1885 = vpop.f32.mrf.mxu0
    %v1886 = vadd.f32 %v1873, %v1885
    %v1887 = vpop.f32.mrf.mxu0
    %1888 = vdwg.mxu0
    %1889 = vmatpush.bf16.msra.mxu0 0
    %1890 = vmatpush.bf16.msra.mxu0 0
    %1891 = vmatpush.bf16.msra.mxu0 0
    %1892 = vmatpush.bf16.msra.mxu0 %v1692
    %1893 = vmatpush.bf16.msra.mxu0 %v1563
    %1894 = vmatpush.bf16.msra.mxu0 %v1559
    %1895 = vmatpush.bf16.msra.mxu0 %v1555
    %1896 = vmatpush.bf16.msra.mxu0 %v1551
    %1897 = vmatmul.bf16.gmra.mxu0 %v1680
    %v1898 = vpop.f32.mrf.mxu0
    %v1899 = vadd.f32 %v1886, %v1898
    %v1900 = vpop.f32.mrf.mxu0
    %1901 = vdwg.mxu0
    %v1902 = vpack.c.bf16 %v829, %v829
    %v1903 = vpack.c.bf16 %v881, %v881
    %v1904 = vpack.c.bf16 %v933, %v933
    %v1905 = vpack.c.bf16 %v985, %v985
    %v1906 = vld [vmem:[%s7] sm:$0xf]
    %v1907 = vld [vmem:[%s7 + $0x4] sm:$0xf]
    %v1908 = vld [vmem:[%s7 + $0x8] sm:$0xf]
    %v1909 = vld [vmem:[%s7 + $0xc] sm:$0xf]
    %v1910 = vld [vmem:[%s7 + $0x10] sm:$0xf]
    %v1911 = vld [vmem:[%s7 + $0x14] sm:$0xf]
    %v1912 = vld [vmem:[%s7 + $0x18] sm:$0xf]
    %v1913 = vld [vmem:[%s7 + $0x1c] sm:$0xf]
    %v1914 = vld [vmem:[%s7 + $0x20] sm:$0xf]
    %v1915 = vld [vmem:[%s7 + $0x24] sm:$0xf]
    %v1916 = vld [vmem:[%s7 + $0x28] sm:$0xf]
    %v1917 = vld [vmem:[%s7 + $0x2c] sm:$0xf]
    %v1918 = vld [vmem:[%s7 + $0x30] sm:$0xf]
    %v1919 = vld [vmem:[%s7 + $0x34] sm:$0xf]
    %v1920 = vld [vmem:[%s7 + $0x38] sm:$0xf]
    %v1921 = vld [vmem:[%s7 + $0x3c] sm:$0xf]
    %v1922 = vld [vmem:[%s7 + $0x40] sm:$0xf]
    %v1923 = vld [vmem:[%s7 + $0x44] sm:$0xf]
    %v1924 = vld [vmem:[%s7 + $0x48] sm:$0xf]
    %v1925 = vld [vmem:[%s7 + $0x4c] sm:$0xf]
    %v1926 = vld [vmem:[%s7 + $0x50] sm:$0xf]
    %v1927 = vld [vmem:[%s7 + $0x54] sm:$0xf]
    %v1928 = vld [vmem:[%s7 + $0x58] sm:$0xf]
    %v1929 = vld [vmem:[%s7 + $0x5c] sm:$0xf]
    %v1930 = vld [vmem:[%s7 + $0x60] sm:$0xf]
    %v1931 = vld [vmem:[%s7 + $0x64] sm:$0xf]
    %v1932 = vld [vmem:[%s7 + $0x68] sm:$0xf]
    %v1933 = vld [vmem:[%s7 + $0x6c] sm:$0xf]
    %v1934 = vld [vmem:[%s7 + $0x70] sm:$0xf]
    %v1935 = vld [vmem:[%s7 + $0x74] sm:$0xf]
    %v1936 = vld [vmem:[%s7 + $0x78] sm:$0xf]
    %v1937 = vld [vmem:[%s7 + $0x7c] sm:$0xf]
    %v1938 = vld [vmem:[%s7 + $0x80] sm:$0xf]
    %v1939 = vld [vmem:[%s7 + $0x84] sm:$0xf]
    %v1940 = vld [vmem:[%s7 + $0x88] sm:$0xf]
    %v1941 = vld [vmem:[%s7 + $0x8c] sm:$0xf]
    %v1942 = vld [vmem:[%s7 + $0x90] sm:$0xf]
    %v1943 = vld [vmem:[%s7 + $0x94] sm:$0xf]
    %v1944 = vld [vmem:[%s7 + $0x98] sm:$0xf]
    %v1945 = vld [vmem:[%s7 + $0x9c] sm:$0xf]
    %v1946 = vld [vmem:[%s7 + $0xa0] sm:$0xf]
    %v1947 = vld [vmem:[%s7 + $0xa4] sm:$0xf]
    %v1948 = vld [vmem:[%s7 + $0xa8] sm:$0xf]
    %v1949 = vld [vmem:[%s7 + $0xac] sm:$0xf]
    %v1950 = vld [vmem:[%s7 + $0xb0] sm:$0xf]
    %v1951 = vld [vmem:[%s7 + $0xb4] sm:$0xf]
    %v1952 = vld [vmem:[%s7 + $0xb8] sm:$0xf]
    %v1953 = vld [vmem:[%s7 + $0xbc] sm:$0xf]
    %v1954 = vld [vmem:[%s7 + $0xc0] sm:$0xf]
    %v1955 = vld [vmem:[%s7 + $0xc4] sm:$0xf]
    %v1956 = vld [vmem:[%s7 + $0xc8] sm:$0xf]
    %v1957 = vld [vmem:[%s7 + $0xcc] sm:$0xf]
    %v1958 = vld [vmem:[%s7 + $0xd0] sm:$0xf]
    %v1959 = vld [vmem:[%s7 + $0xd4] sm:$0xf]
    %v1960 = vld [vmem:[%s7 + $0xd8] sm:$0xf]
    %v1961 = vld [vmem:[%s7 + $0xdc] sm:$0xf]
    %v1962 = vld [vmem:[%s7 + $0xe0] sm:$0xf]
    %v1963 = vld [vmem:[%s7 + $0xe4] sm:$0xf]
    %v1964 = vld [vmem:[%s7 + $0xe8] sm:$0xf]
    %v1965 = vld [vmem:[%s7 + $0xec] sm:$0xf]
    %v1966 = vld [vmem:[%s7 + $0xf0] sm:$0xf]
    %v1967 = vld [vmem:[%s7 + $0xf4] sm:$0xf]
    %v1968 = vld [vmem:[%s7 + $0xf8] sm:$0xf]
    %v1969 = vld [vmem:[%s7 + $0xfc] sm:$0xf]
    %v1970 = vld [vmem:[%s8] sm:$0x1]
    %v1972 = vperm.slane %v1970, 0
    %v2038 = vunpack.c.l.b16 %v1906
    %v2039 = vunpack.c.l.b16 %v1907
    %v2040 = vunpack.c.l.b16 %v1908
    %v2041 = vunpack.c.l.b16 %v1909
    %v2042 = vunpack.c.l.b16 %v1910
    %v2043 = vunpack.c.l.b16 %v1911
    %v2044 = vunpack.c.l.b16 %v1912
    %v2045 = vunpack.c.l.b16 %v1913
    %v2046 = vunpack.c.l.b16 %v1914
    %v2047 = vunpack.c.l.b16 %v1915
    %v2048 = vunpack.c.l.b16 %v1916
    %v2049 = vunpack.c.l.b16 %v1917
    %v2050 = vunpack.c.l.b16 %v1918
    %v2051 = vunpack.c.l.b16 %v1919
    %v2052 = vunpack.c.l.b16 %v1920
    %v2053 = vunpack.c.l.b16 %v1921
    %v2054 = vunpack.c.l.b16 %v1922
    %v2055 = vunpack.c.l.b16 %v1923
    %v2056 = vunpack.c.l.b16 %v1924
    %v2057 = vunpack.c.l.b16 %v1925
    %v2058 = vunpack.c.l.b16 %v1926
    %v2059 = vunpack.c.l.b16 %v1927
    %v2060 = vunpack.c.l.b16 %v1928
    %v2061 = vunpack.c.l.b16 %v1929
    %v2062 = vunpack.c.l.b16 %v1930
    %v2063 = vunpack.c.l.b16 %v1931
    %v2064 = vunpack.c.l.b16 %v1932
    %v2065 = vunpack.c.l.b16 %v1933
    %v2066 = vunpack.c.l.b16 %v1934
    %v2067 = vunpack.c.l.b16 %v1935
    %v2068 = vunpack.c.l.b16 %v1936
    %v2069 = vunpack.c.l.b16 %v1937
    %v2070 = vunpack.c.l.b16 %v1938
    %v2071 = vunpack.c.l.b16 %v1939
    %v2072 = vunpack.c.l.b16 %v1940
    %v2073 = vunpack.c.l.b16 %v1941
    %v2074 = vunpack.c.l.b16 %v1942
    %v2075 = vunpack.c.l.b16 %v1943
    %v2076 = vunpack.c.l.b16 %v1944
    %v2077 = vunpack.c.l.b16 %v1945
    %v2078 = vunpack.c.l.b16 %v1946
    %v2079 = vunpack.c.l.b16 %v1947
    %v2080 = vunpack.c.l.b16 %v1948
    %v2081 = vunpack.c.l.b16 %v1949
    %v2082 = vunpack.c.l.b16 %v1950
    %v2083 = vunpack.c.l.b16 %v1951
    %v2084 = vunpack.c.l.b16 %v1952
    %v2085 = vunpack.c.l.b16 %v1953
    %v2086 = vunpack.c.l.b16 %v1954
    %v2087 = vunpack.c.l.b16 %v1955
    %v2088 = vunpack.c.l.b16 %v1956
    %v2089 = vunpack.c.l.b16 %v1957
    %v2090 = vunpack.c.l.b16 %v1958
    %v2091 = vunpack.c.l.b16 %v1959
    %v2092 = vunpack.c.l.b16 %v1960
    %v2093 = vunpack.c.l.b16 %v1961
    %v2094 = vunpack.c.l.b16 %v1962
    %v2095 = vunpack.c.l.b16 %v1963
    %v2096 = vunpack.c.l.b16 %v1964
    %v2097 = vunpack.c.l.b16 %v1965
    %v2098 = vunpack.c.l.b16 %v1966
    %v2099 = vunpack.c.l.b16 %v1967
    %v2100 = vunpack.c.l.b16 %v1968
    %v2101 = vunpack.c.l.b16 %v1969
    %v2102 = vpack.c.b16 %v2039, %v2038
    %v2103 = vpack.c.b16 %v2041, %v2040
    %v2104 = vpack.c.b16 %v2043, %v2042
    %v2105 = vpack.c.b16 %v2045, %v2044
    %v2106 = vpack.c.b16 %v2047, %v2046
    %v2107 = vpack.c.b16 %v2049, %v2048
    %v2108 = vpack.c.b16 %v2051, %v2050
    %v2109 = vpack.c.b16 %v2053, %v2052
    %v2110 = vpack.c.b16 %v2055, %v2054
    %v2111 = vpack.c.b16 %v2057, %v2056
    %v2112 = vpack.c.b16 %v2059, %v2058
    %v2113 = vpack.c.b16 %v2061, %v2060
    %v2114 = vpack.c.b16 %v2063, %v2062
    %v2115 = vpack.c.b16 %v2065, %v2064
    %v2116 = vpack.c.b16 %v2067, %v2066
    %v2117 = vpack.c.b16 %v2069, %v2068
    %v2118 = vpack.c.b16 %v2071, %v2070
    %v2119 = vpack.c.b16 %v2073, %v2072
    %v2120 = vpack.c.b16 %v2075, %v2074
    %v2121 = vpack.c.b16 %v2077, %v2076
    %v2122 = vpack.c.b16 %v2079, %v2078
    %v2123 = vpack.c.b16 %v2081, %v2080
    %v2124 = vpack.c.b16 %v2083, %v2082
    %v2125 = vpack.c.b16 %v2085, %v2084
    %v2126 = vpack.c.b16 %v2087, %v2086
    %v2127 = vpack.c.b16 %v2089, %v2088
    %v2128 = vpack.c.b16 %v2091, %v2090
    %v2129 = vpack.c.b16 %v2093, %v2092
    %v2130 = vpack.c.b16 %v2095, %v2094
    %v2131 = vpack.c.b16 %v2097, %v2096
    %v2132 = vpack.c.b16 %v2099, %v2098
    %v2133 = vpack.c.b16 %v2101, %v2100
    %2166 = vmatpush.bf16.msra.mxu0 %v2109
    %2167 = vmatpush.bf16.msra.mxu0 %v2108
    %2168 = vmatpush.bf16.msra.mxu0 %v2107
    %2169 = vmatpush.bf16.msra.mxu0 %v2106
    %2170 = vmatpush.bf16.msra.mxu0 %v2105
    %2171 = vmatpush.bf16.msra.mxu0 %v2104
    %2172 = vmatpush.bf16.msra.mxu0 %v2103
    %2173 = vmatpush.bf16.msra.mxu0 %v2102
    %2174 = vmatmul.bf16.gmra.mxu0 %v1902
    %v2175 = vpop.f32.mrf.mxu0
    %v2176 = vadd.f32 %v1972, %v2175
    %v2177 = vpop.f32.mrf.mxu0
    %2178 = vdwg.mxu0
    %2179 = vmatpush.bf16.msra.mxu0 %v2117
    %2180 = vmatpush.bf16.msra.mxu0 %v2116
    %2181 = vmatpush.bf16.msra.mxu0 %v2115
    %2182 = vmatpush.bf16.msra.mxu0 %v2114
    %2183 = vmatpush.bf16.msra.mxu0 %v2113
    %2184 = vmatpush.bf16.msra.mxu0 %v2112
    %2185 = vmatpush.bf16.msra.mxu0 %v2111
    %2186 = vmatpush.bf16.msra.mxu0 %v2110
    %2187 = vmatmul.bf16.gmra.mxu0 %v1903
    %v2188 = vpop.f32.mrf.mxu0
    %v2189 = vadd.f32 %v2176, %v2188
    %v2190 = vpop.f32.mrf.mxu0
    %2191 = vdwg.mxu0
    %2192 = vmatpush.bf16.msra.mxu0 %v2125
    %2193 = vmatpush.bf16.msra.mxu0 %v2124
    %2194 = vmatpush.bf16.msra.mxu0 %v2123
    %2195 = vmatpush.bf16.msra.mxu0 %v2122
    %2196 = vmatpush.bf16.msra.mxu0 %v2121
    %2197 = vmatpush.bf16.msra.mxu0 %v2120
    %2198 = vmatpush.bf16.msra.mxu0 %v2119
    %2199 = vmatpush.bf16.msra.mxu0 %v2118
    %2200 = vmatmul.bf16.gmra.mxu0 %v1904
    %v2201 = vpop.f32.mrf.mxu0
    %v2202 = vadd.f32 %v2189, %v2201
    %v2203 = vpop.f32.mrf.mxu0
    %2204 = vdwg.mxu0
    %2205 = vmatpush.bf16.msra.mxu0 %v2133
    %2206 = vmatpush.bf16.msra.mxu0 %v2132
    %2207 = vmatpush.bf16.msra.mxu0 %v2131
    %2208 = vmatpush.bf16.msra.mxu0 %v2130
    %2209 = vmatpush.bf16.msra.mxu0 %v2129
    %2210 = vmatpush.bf16.msra.mxu0 %v2128
    %2211 = vmatpush.bf16.msra.mxu0 %v2127
    %2212 = vmatpush.bf16.msra.mxu0 %v2126
    %2213 = vmatmul.bf16.gmra.mxu0 %v1905
    %v2214 = vpop.f32.mrf.mxu0
    %v2215 = vadd.f32 %v2202, %v2214
    %v2216 = vpop.f32.mrf.mxu0
    %2217 = vdwg.mxu0
    %v2218 = vpack.c.bf16 %v1743, %v1743
    %v2219 = vpack.c.bf16 %v1795, %v1795
    %v2220 = vpack.c.bf16 %v1847, %v1847
    %v2221 = vpack.c.bf16 %v1899, %v1899
    %v2222 = vld [vmem:[%s9] sm:$0xf]
    %v2223 = vld [vmem:[%s9 + $0x4] sm:$0xf]
    %v2224 = vld [vmem:[%s9 + $0x8] sm:$0xf]
    %v2225 = vld [vmem:[%s9 + $0xc] sm:$0xf]
    %v2226 = vld [vmem:[%s9 + $0x10] sm:$0xf]
    %v2227 = vld [vmem:[%s9 + $0x14] sm:$0xf]
    %v2228 = vld [vmem:[%s9 + $0x18] sm:$0xf]
    %v2229 = vld [vmem:[%s9 + $0x1c] sm:$0xf]
    %v2230 = vld [vmem:[%s9 + $0x20] sm:$0xf]
    %v2231 = vld [vmem:[%s9 + $0x24] sm:$0xf]
    %v2232 = vld [vmem:[%s9 + $0x28] sm:$0xf]
    %v2233 = vld [vmem:[%s9 + $0x2c] sm:$0xf]
    %v2234 = vld [vmem:[%s9 + $0x30] sm:$0xf]
    %v2235 = vld [vmem:[%s9 + $0x34] sm:$0xf]
    %v2236 = vld [vmem:[%s9 + $0x38] sm:$0xf]
    %v2237 = vld [vmem:[%s9 + $0x3c] sm:$0xf]
    %v2238 = vld [vmem:[%s9 + $0x40] sm:$0xf]
    %v2239 = vld [vmem:[%s9 + $0x44] sm:$0xf]
    %v2240 = vld [vmem:[%s9 + $0x48] sm:$0xf]
    %v2241 = vld [vmem:[%s9 + $0x4c] sm:$0xf]
    %v2242 = vld [vmem:[%s9 + $0x50] sm:$0xf]
    %v2243 = vld [vmem:[%s9 + $0x54] sm:$0xf]
    %v2244 = vld [vmem:[%s9 + $0x58] sm:$0xf]
    %v2245 = vld [vmem:[%s9 + $0x5c] sm:$0xf]
    %v2246 = vld [vmem:[%s9 + $0x60] sm:$0xf]
    %v2247 = vld [vmem:[%s9 + $0x64] sm:$0xf]
    %v2248 = vld [vmem:[%s9 + $0x68] sm:$0xf]
    %v2249 = vld [vmem:[%s9 + $0x6c] sm:$0xf]
    %v2250 = vld [vmem:[%s9 + $0x70] sm:$0xf]
    %v2251 = vld [vmem:[%s9 + $0x74] sm:$0xf]
    %v2252 = vld [vmem:[%s9 + $0x78] sm:$0xf]
    %v2253 = vld [vmem:[%s9 + $0x7c] sm:$0xf]
    %v2254 = vld [vmem:[%s9 + $0x80] sm:$0xf]
    %v2255 = vld [vmem:[%s9 + $0x84] sm:$0xf]
    %v2256 = vld [vmem:[%s9 + $0x88] sm:$0xf]
    %v2257 = vld [vmem:[%s9 + $0x8c] sm:$0xf]
    %v2258 = vld [vmem:[%s9 + $0x90] sm:$0xf]
    %v2259 = vld [vmem:[%s9 + $0x94] sm:$0xf]
    %v2260 = vld [vmem:[%s9 + $0x98] sm:$0xf]
    %v2261 = vld [vmem:[%s9 + $0x9c] sm:$0xf]
    %v2262 = vld [vmem:[%s9 + $0xa0] sm:$0xf]
    %v2263 = vld [vmem:[%s9 + $0xa4] sm:$0xf]
    %v2264 = vld [vmem:[%s9 + $0xa8] sm:$0xf]
    %v2265 = vld [vmem:[%s9 + $0xac] sm:$0xf]
    %v2266 = vld [vmem:[%s9 + $0xb0] sm:$0xf]
    %v2267 = vld [vmem:[%s9 + $0xb4] sm:$0xf]
    %v2268 = vld [vmem:[%s9 + $0xb8] sm:$0xf]
    %v2269 = vld [vmem:[%s9 + $0xbc] sm:$0xf]
    %v2270 = vld [vmem:[%s9 + $0xc0] sm:$0xf]
    %v2271 = vld [vmem:[%s9 + $0xc4] sm:$0xf]
    %v2272 = vld [vmem:[%s9 + $0xc8] sm:$0xf]
    %v2273 = vld [vmem:[%s9 + $0xcc] sm:$0xf]
    %v2274 = vld [vmem:[%s9 + $0xd0] sm:$0xf]
    %v2275 = vld [vmem:[%s9 + $0xd4] sm:$0xf]
    %v2276 = vld [vmem:[%s9 + $0xd8] sm:$0xf]
    %v2277 = vld [vmem:[%s9 + $0xdc] sm:$0xf]
    %v2278 = vld [vmem:[%s9 + $0xe0] sm:$0xf]
    %v2279 = vld [vmem:[%s9 + $0xe4] sm:$0xf]
    %v2280 = vld [vmem:[%s9 + $0xe8] sm:$0xf]
    %v2281 = vld [vmem:[%s9 + $0xec] sm:$0xf]
    %v2282 = vld [vmem:[%s9 + $0xf0] sm:$0xf]
    %v2283 = vld [vmem:[%s9 + $0xf4] sm:$0xf]
    %v2284 = vld [vmem:[%s9 + $0xf8] sm:$0xf]
    %v2285 = vld [vmem:[%s9 + $0xfc] sm:$0xf]
    %v2286 = vld [vmem:[%s10] sm:$0x1]
    %v2288 = vperm.slane %v2286, 0
    %v2354 = vunpack.c.l.b16 %v2222
    %v2355 = vunpack.c.l.b16 %v2223
    %v2356 = vunpack.c.l.b16 %v2224
    %v2357 = vunpack.c.l.b16 %v2225
    %v2358 = vunpack.c.l.b16 %v2226
    %v2359 = vunpack.c.l.b16 %v2227
    %v2360 = vunpack.c.l.b16 %v2228
    %v2361 = vunpack.c.l.b16 %v2229
    %v2362 = vunpack.c.l.b16 %v2230
    %v2363 = vunpack.c.l.b16 %v2231
    %v2364 = vunpack.c.l.b16 %v2232
    %v2365 = vunpack.c.l.b16 %v2233
    %v2366 = vunpack.c.l.b16 %v2234
    %v2367 = vunpack.c.l.b16 %v2235
    %v2368 = vunpack.c.l.b16 %v2236
    %v2369 = vunpack.c.l.b16 %v2237
    %v2370 = vunpack.c.l.b16 %v2238
    %v2371 = vunpack.c.l.b16 %v2239
    %v2372 = vunpack.c.l.b16 %v2240
    %v2373 = vunpack.c.l.b16 %v2241
    %v2374 = vunpack.c.l.b16 %v2242
    %v2375 = vunpack.c.l.b16 %v2243
    %v2376 = vunpack.c.l.b16 %v2244
    %v2377 = vunpack.c.l.b16 %v2245
    %v2378 = vunpack.c.l.b16 %v2246
    %v2379 = vunpack.c.l.b16 %v2247
    %v2380 = vunpack.c.l.b16 %v2248
    %v2381 = vunpack.c.l.b16 %v2249
    %v2382 = vunpack.c.l.b16 %v2250
    %v2383 = vunpack.c.l.b16 %v2251
    %v2384 = vunpack.c.l.b16 %v2252
    %v2385 = vunpack.c.l.b16 %v2253
    %v2386 = vunpack.c.l.b16 %v2254
    %v2387 = vunpack.c.l.b16 %v2255
    %v2388 = vunpack.c.l.b16 %v2256
    %v2389 = vunpack.c.l.b16 %v2257
    %v2390 = vunpack.c.l.b16 %v2258
    %v2391 = vunpack.c.l.b16 %v2259
    %v2392 = vunpack.c.l.b16 %v2260
    %v2393 = vunpack.c.l.b16 %v2261
    %v2394 = vunpack.c.l.b16 %v2262
    %v2395 = vunpack.c.l.b16 %v2263
    %v2396 = vunpack.c.l.b16 %v2264
    %v2397 = vunpack.c.l.b16 %v2265
    %v2398 = vunpack.c.l.b16 %v2266
    %v2399 = vunpack.c.l.b16 %v2267
    %v2400 = vunpack.c.l.b16 %v2268
    %v2401 = vunpack.c.l.b16 %v2269
    %v2402 = vunpack.c.l.b16 %v2270
    %v2403 = vunpack.c.l.b16 %v2271
    %v2404 = vunpack.c.l.b16 %v2272
    %v2405 = vunpack.c.l.b16 %v2273
    %v2406 = vunpack.c.l.b16 %v2274
    %v2407 = vunpack.c.l.b16 %v2275
    %v2408 = vunpack.c.l.b16 %v2276
    %v2409 = vunpack.c.l.b16 %v2277
    %v2410 = vunpack.c.l.b16 %v2278
    %v2411 = vunpack.c.l.b16 %v2279
    %v2412 = vunpack.c.l.b16 %v2280
    %v2413 = vunpack.c.l.b16 %v2281
    %v2414 = vunpack.c.l.b16 %v2282
    %v2415 = vunpack.c.l.b16 %v2283
    %v2416 = vunpack.c.l.b16 %v2284
    %v2417 = vunpack.c.l.b16 %v2285
    %v2418 = vpack.c.b16 %v2355, %v2354
    %v2419 = vpack.c.b16 %v2357, %v2356
    %v2420 = vpack.c.b16 %v2359, %v2358
    %v2421 = vpack.c.b16 %v2361, %v2360
    %v2422 = vpack.c.b16 %v2363, %v2362
    %v2423 = vpack.c.b16 %v2365, %v2364
    %v2424 = vpack.c.b16 %v2367, %v2366
    %v2425 = vpack.c.b16 %v2369, %v2368
    %v2426 = vpack.c.b16 %v2371, %v2370
    %v2427 = vpack.c.b16 %v2373, %v2372
    %v2428 = vpack.c.b16 %v2375, %v2374
    %v2429 = vpack.c.b16 %v2377, %v2376
    %v2430 = vpack.c.b16 %v2379, %v2378
    %v2431 = vpack.c.b16 %v2381, %v2380
    %v2432 = vpack.c.b16 %v2383, %v2382
    %v2433 = vpack.c.b16 %v2385, %v2384
    %v2434 = vpack.c.b16 %v2387, %v2386
    %v2435 = vpack.c.b16 %v2389, %v2388
    %v2436 = vpack.c.b16 %v2391, %v2390
    %v2437 = vpack.c.b16 %v2393, %v2392
    %v2438 = vpack.c.b16 %v2395, %v2394
    %v2439 = vpack.c.b16 %v2397, %v2396
    %v2440 = vpack.c.b16 %v2399, %v2398
    %v2441 = vpack.c.b16 %v2401, %v2400
    %v2442 = vpack.c.b16 %v2403, %v2402
    %v2443 = vpack.c.b16 %v2405, %v2404
    %v2444 = vpack.c.b16 %v2407, %v2406
    %v2445 = vpack.c.b16 %v2409, %v2408
    %v2446 = vpack.c.b16 %v2411, %v2410
    %v2447 = vpack.c.b16 %v2413, %v2412
    %v2448 = vpack.c.b16 %v2415, %v2414
    %v2449 = vpack.c.b16 %v2417, %v2416
    %2482 = vmatpush.bf16.msra.mxu0 %v2425
    %2483 = vmatpush.bf16.msra.mxu0 %v2424
    %2484 = vmatpush.bf16.msra.mxu0 %v2423
    %2485 = vmatpush.bf16.msra.mxu0 %v2422
    %2486 = vmatpush.bf16.msra.mxu0 %v2421
    %2487 = vmatpush.bf16.msra.mxu0 %v2420
    %2488 = vmatpush.bf16.msra.mxu0 %v2419
    %2489 = vmatpush.bf16.msra.mxu0 %v2418
    %2490 = vmatmul.bf16.gmra.mxu0 %v2218
    %v2491 = vpop.f32.mrf.mxu0
    %v2492 = vadd.f32 %v2288, %v2491
    %v2493 = vpop.f32.mrf.mxu0
    %2494 = vdwg.mxu0
    %2495 = vmatpush.bf16.msra.mxu0 %v2433
    %2496 = vmatpush.bf16.msra.mxu0 %v2432
    %2497 = vmatpush.bf16.msra.mxu0 %v2431
    %2498 = vmatpush.bf16.msra.mxu0 %v2430
    %2499 = vmatpush.bf16.msra.mxu0 %v2429
    %2500 = vmatpush.bf16.msra.mxu0 %v2428
    %2501 = vmatpush.bf16.msra.mxu0 %v2427
    %2502 = vmatpush.bf16.msra.mxu0 %v2426
    %2503 = vmatmul.bf16.gmra.mxu0 %v2219
    %v2504 = vpop.f32.mrf.mxu0
    %v2505 = vadd.f32 %v2492, %v2504
    %v2506 = vpop.f32.mrf.mxu0
    %2507 = vdwg.mxu0
    %2508 = vmatpush.bf16.msra.mxu0 %v2441
    %2509 = vmatpush.bf16.msra.mxu0 %v2440
    %2510 = vmatpush.bf16.msra.mxu0 %v2439
    %2511 = vmatpush.bf16.msra.mxu0 %v2438
    %2512 = vmatpush.bf16.msra.mxu0 %v2437
    %2513 = vmatpush.bf16.msra.mxu0 %v2436
    %2514 = vmatpush.bf16.msra.mxu0 %v2435
    %2515 = vmatpush.bf16.msra.mxu0 %v2434
    %2516 = vmatmul.bf16.gmra.mxu0 %v2220
    %v2517 = vpop.f32.mrf.mxu0
    %v2518 = vadd.f32 %v2505, %v2517
    %v2519 = vpop.f32.mrf.mxu0
    %2520 = vdwg.mxu0
    %2521 = vmatpush.bf16.msra.mxu0 %v2449
    %2522 = vmatpush.bf16.msra.mxu0 %v2448
    %2523 = vmatpush.bf16.msra.mxu0 %v2447
    %2524 = vmatpush.bf16.msra.mxu0 %v2446
    %2525 = vmatpush.bf16.msra.mxu0 %v2445
    %2526 = vmatpush.bf16.msra.mxu0 %v2444
    %2527 = vmatpush.bf16.msra.mxu0 %v2443
    %2528 = vmatpush.bf16.msra.mxu0 %v2442
    %2529 = vmatmul.bf16.gmra.mxu0 %v2221
    %v2530 = vpop.f32.mrf.mxu0
    %v2531 = vadd.f32 %v2518, %v2530
    %v2532 = vpop.f32.mrf.mxu0
    %2533 = vdwg.mxu0
    %v2534 = vld [vmem:[%s3] sm:$0x3]
    %v2535 = vpack.c.bf16 %v2534, %v2534
    %v2536 = vld [vmem:[%s11] sm:$0xf]
    %v2537 = vld [vmem:[%s11 + $0x4] sm:$0xf]
    %v2538 = vpack.c.bf16 %v2215, %v2215
    %v2539 = vld [vmem:[%s12] sm:$0xf]
    %v2540 = vld [vmem:[%s12 + $0x4] sm:$0xf]
    %v2541 = vld [vmem:[%s12 + $0x8] sm:$0xf]
    %v2542 = vld [vmem:[%s12 + $0xc] sm:$0xf]
    %v2547 = vunpack.c.l.b16 %v2539
    %v2548 = vunpack.c.l.b16 %v2540
    %v2549 = vunpack.c.l.b16 %v2541
    %v2550 = vunpack.c.l.b16 %v2542
    %v2551 = vpack.c.b16 %v2548, %v2547
    %v2552 = vpack.c.b16 %v2550, %v2549
    %vm2555 = vcmask 261120
    %v2557 = vsel %vm2555, %v2538, 0
    %2559 = vmatpush.bf16.msra.mxu0 0
    %2560 = vmatpush.bf16.msra.mxu0 0
    %2561 = vmatpush.bf16.msra.mxu0 0
    %2562 = vmatpush.bf16.msra.mxu0 0
    %2563 = vmatpush.bf16.msra.mxu0 0
    %2564 = vmatpush.bf16.msra.mxu0 0
    %2565 = vmatpush.bf16.msra.mxu0 %v2552
    %2566 = vmatpush.bf16.msra.mxu0 %v2551
    %2567 = vmatmul.bf16.gmra.mxu0 %v2557
    %v2568 = vpop.f32.mrf.mxu0
    %v2569 = vadd.f32 0.0, %v2568
    %v2570 = vpop.f32.mrf.mxu0
    %2571 = vdwg.mxu0
    %v2574 = vunpack.c.l.b16 %v2536
    %v2575 = vunpack.c.l.b16 %v2537
    %v2576 = vpack.c.b16 %v2575, %v2574
    %vm2578 = vcmask 130048
    %v2580 = vsel %vm2578, %v2535, 0
    %2582 = vmatpush.bf16.msra.mxu0 0
    %2583 = vmatpush.bf16.msra.mxu0 0
    %2584 = vmatpush.bf16.msra.mxu0 0
    %2585 = vmatpush.bf16.msra.mxu0 0
    %2586 = vmatpush.bf16.msra.mxu0 0
    %2587 = vmatpush.bf16.msra.mxu0 0
    %2588 = vmatpush.bf16.msra.mxu0 0
    %2589 = vmatpush.bf16.msra.mxu0 %v2576
    %2590 = vmatmul.bf16.gmra.mxu0 %v2580
    %v2591 = vpop.f32.mrf.mxu0
    %v2592 = vadd.f32 %v2569, %v2591
    %v2593 = vpop.f32.mrf.mxu0
    %2594 = vdwg.mxu0
    %v2595 = vpack.c.bf16 %v2531, %v2531
    %v2596 = vld [vmem:[%s13] sm:$0xf]
    %v2597 = vld [vmem:[%s13 + $0x4] sm:$0xf]
    %v2598 = vld [vmem:[%s13 + $0x8] sm:$0xf]
    %v2599 = vld [vmem:[%s13 + $0xc] sm:$0xf]
    %v2604 = vunpack.c.l.b16 %v2596
    %v2605 = vunpack.c.l.b16 %v2597
    %v2606 = vunpack.c.l.b16 %v2598
    %v2607 = vunpack.c.l.b16 %v2599
    %v2608 = vpack.c.b16 %v2605, %v2604
    %v2609 = vpack.c.b16 %v2607, %v2606
    %v2613 = vsel %vm2555, %v2595, 0
    %2615 = vmatpush.bf16.msra.mxu0 0
    %2616 = vmatpush.bf16.msra.mxu0 0
    %2617 = vmatpush.bf16.msra.mxu0 0
    %2618 = vmatpush.bf16.msra.mxu0 0
    %2619 = vmatpush.bf16.msra.mxu0 0
    %2620 = vmatpush.bf16.msra.mxu0 0
    %2621 = vmatpush.bf16.msra.mxu0 %v2609
    %2622 = vmatpush.bf16.msra.mxu0 %v2608
    %2623 = vmatmul.bf16.gmra.mxu0 %v2613
    %v2624 = vpop.f32.mrf.mxu0
    %v2625 = vadd.f32 0.0, %v2624
    %v2626 = vpop.f32.mrf.mxu0
    %2627 = vdwg.mxu0
    %v2628 = vadd.f32 %v2592, %v2625
    %v2629 = vld [vmem:[%s14] sm:$0x1]
    %v2631 = vperm.slane %v2629, 0
    %v2633 = vadd.f32 %v2628, %v2631
    %v2634 = vld [vmem:[%s4] sm:$0x3]
    %v2635 = vmul.f32 %v2634, %v2633
    %vm2636 = vcmp.gt.f32.partialorder %v2635, 20.0
    %v2637 = vmin.f32 %v2635, 20.0
    %v2638 = vmul.f32 %v2637, 1.442695
    %v2639 = vpow.pop %v2638
    %v2640 = vadd.f32 %v2639, 1.0
    %v2641 = vlog2.pop %v2640
    %v2642 = vmul.f32 %v2641, 0.6931472
    %v2643 = vmul.f32 -0.5, %v2639
    %v2644 = vadd.f32 %v2643, 1.0
    %v2645 = vmul.f32 %v2644, %v2639
    %v2646 = vand.u32 2147483647, %v2639
    %vm2647 = vcmp.lt.f32.partialorder %v2646, 0.0004427343
    %v2648 = vsel %vm2647, %v2645, %v2642
    %v2649 = vsel %vm2636, %v2635, %v2648
    %v2650 = vpack.c.bf16 %v2649, %v2649
    %v2651 = vld [vmem:[%s15] sm:$0xf]
    %v2652 = vld [vmem:[%s15 + $0x4] sm:$0xf]
    %v2653 = vld [vmem:[%s15 + $0x8] sm:$0xf]
    %v2654 = vld [vmem:[%s15 + $0xc] sm:$0xf]
    %v2655 = vld [vmem:[%s15 + $0x10] sm:$0xf]
    %v2656 = vld [vmem:[%s15 + $0x14] sm:$0xf]
    %v2657 = vld [vmem:[%s15 + $0x18] sm:$0xf]
    %v2658 = vld [vmem:[%s15 + $0x1c] sm:$0xf]
    %v2659 = vld [vmem:[%s15 + $0x20] sm:$0xf]
    %v2660 = vld [vmem:[%s15 + $0x24] sm:$0xf]
    %v2661 = vld [vmem:[%s15 + $0x28] sm:$0xf]
    %v2662 = vld [vmem:[%s15 + $0x2c] sm:$0xf]
    %v2663 = vld [vmem:[%s15 + $0x30] sm:$0xf]
    %v2664 = vld [vmem:[%s15 + $0x34] sm:$0xf]
    %v2665 = vld [vmem:[%s15 + $0x38] sm:$0xf]
    %v2666 = vld [vmem:[%s15 + $0x3c] sm:$0xf]
    %v2667 = vld [vmem:[%s16] sm:$0x1]
    %v2669 = vperm.slane %v2667, 0
    %v2687 = vunpack.c.l.b16 %v2651
    %v2688 = vunpack.c.l.b16 %v2652
    %v2689 = vunpack.c.l.b16 %v2653
    %v2690 = vunpack.c.l.b16 %v2654
    %v2691 = vunpack.c.l.b16 %v2655
    %v2692 = vunpack.c.l.b16 %v2656
    %v2693 = vunpack.c.l.b16 %v2657
    %v2694 = vunpack.c.l.b16 %v2658
    %v2695 = vunpack.c.l.b16 %v2659
    %v2696 = vunpack.c.l.b16 %v2660
    %v2697 = vunpack.c.l.b16 %v2661
    %v2698 = vunpack.c.l.b16 %v2662
    %v2699 = vunpack.c.l.b16 %v2663
    %v2700 = vunpack.c.l.b16 %v2664
    %v2701 = vunpack.c.l.b16 %v2665
    %v2702 = vunpack.c.l.b16 %v2666
    %v2703 = vpack.c.b16 %v2688, %v2687
    %v2704 = vpack.c.b16 %v2690, %v2689
    %v2705 = vpack.c.b16 %v2692, %v2691
    %v2706 = vpack.c.b16 %v2694, %v2693
    %v2707 = vpack.c.b16 %v2696, %v2695
    %v2708 = vpack.c.b16 %v2698, %v2697
    %v2709 = vpack.c.b16 %v2700, %v2699
    %v2710 = vpack.c.b16 %v2702, %v2701
    %2719 = vmatpush.bf16.msra.mxu0 %v2710
    %2720 = vmatpush.bf16.msra.mxu0 %v2709
    %2721 = vmatpush.bf16.msra.mxu0 %v2708
    %2722 = vmatpush.bf16.msra.mxu0 %v2707
    %2723 = vmatpush.bf16.msra.mxu0 %v2706
    %2724 = vmatpush.bf16.msra.mxu0 %v2705
    %2725 = vmatpush.bf16.msra.mxu0 %v2704
    %2726 = vmatpush.bf16.msra.mxu0 %v2703
    %2727 = vmatmul.bf16.gmra.mxu0 %v2650
    %v2728 = vpop.f32.mrf.mxu0
    %v2729 = vadd.f32 %v2669, %v2728
    %v2730 = vpop.f32.mrf.mxu0
    %2731 = vdwg.mxu0
    %v2732 = vld [vmem:[%s5] sm:$0x3]
    %v2733 = vmul.f32 %v2732, %v2729
    %vm2734 = vcmp.gt.f32.partialorder %v2733, 20.0
    %v2735 = vmin.f32 %v2733, 20.0
    %v2736 = vmul.f32 %v2735, 1.442695
    %v2737 = vpow.pop %v2736
    %v2738 = vadd.f32 %v2737, 1.0
    %v2739 = vlog2.pop %v2738
    %v2740 = vmul.f32 %v2739, 0.6931472
    %v2741 = vmul.f32 -0.5, %v2737
    %v2742 = vadd.f32 %v2741, 1.0
    %v2743 = vmul.f32 %v2742, %v2737
    %v2744 = vand.u32 2147483647, %v2737
    %vm2745 = vcmp.lt.f32.partialorder %v2744, 0.0004427343
    %v2746 = vsel %vm2745, %v2743, %v2740
    %v2747 = vsel %vm2734, %v2733, %v2746
    %v2748 = vpack.c.bf16 %v2747, %v2747
    %v2749 = vld [vmem:[%s17] sm:$0xf]
    %v2750 = vld [vmem:[%s17 + $0x4] sm:$0xf]
    %v2751 = vld [vmem:[%s17 + $0x8] sm:$0xf]
    %v2752 = vld [vmem:[%s17 + $0xc] sm:$0xf]
    %v2753 = vld [vmem:[%s17 + $0x10] sm:$0xf]
    %v2754 = vld [vmem:[%s17 + $0x14] sm:$0xf]
    %v2755 = vld [vmem:[%s17 + $0x18] sm:$0xf]
    %v2756 = vld [vmem:[%s17 + $0x1c] sm:$0xf]
    %v2757 = vld [vmem:[%s17 + $0x20] sm:$0xf]
    %v2758 = vld [vmem:[%s17 + $0x24] sm:$0xf]
    %v2759 = vld [vmem:[%s17 + $0x28] sm:$0xf]
    %v2760 = vld [vmem:[%s17 + $0x2c] sm:$0xf]
    %v2761 = vld [vmem:[%s17 + $0x30] sm:$0xf]
    %v2762 = vld [vmem:[%s17 + $0x34] sm:$0xf]
    %v2763 = vld [vmem:[%s17 + $0x38] sm:$0xf]
    %v2764 = vld [vmem:[%s17 + $0x3c] sm:$0xf]
    %v2765 = vld [vmem:[%s18] sm:$0x1]
    %v2767 = vperm.slane %v2765, 0
    %v2785 = vunpack.c.l.b16 %v2749
    %v2786 = vunpack.c.l.b16 %v2750
    %v2787 = vunpack.c.l.b16 %v2751
    %v2788 = vunpack.c.l.b16 %v2752
    %v2789 = vunpack.c.l.b16 %v2753
    %v2790 = vunpack.c.l.b16 %v2754
    %v2791 = vunpack.c.l.b16 %v2755
    %v2792 = vunpack.c.l.b16 %v2756
    %v2793 = vunpack.c.l.b16 %v2757
    %v2794 = vunpack.c.l.b16 %v2758
    %v2795 = vunpack.c.l.b16 %v2759
    %v2796 = vunpack.c.l.b16 %v2760
    %v2797 = vunpack.c.l.b16 %v2761
    %v2798 = vunpack.c.l.b16 %v2762
    %v2799 = vunpack.c.l.b16 %v2763
    %v2800 = vunpack.c.l.b16 %v2764
    %v2801 = vpack.c.b16 %v2786, %v2785
    %v2802 = vpack.c.b16 %v2788, %v2787
    %v2803 = vpack.c.b16 %v2790, %v2789
    %v2804 = vpack.c.b16 %v2792, %v2791
    %v2805 = vpack.c.b16 %v2794, %v2793
    %v2806 = vpack.c.b16 %v2796, %v2795
    %v2807 = vpack.c.b16 %v2798, %v2797
    %v2808 = vpack.c.b16 %v2800, %v2799
    %2817 = vmatpush.bf16.msra.mxu0 %v2808
    %2818 = vmatpush.bf16.msra.mxu0 %v2807
    %2819 = vmatpush.bf16.msra.mxu0 %v2806
    %2820 = vmatpush.bf16.msra.mxu0 %v2805
    %2821 = vmatpush.bf16.msra.mxu0 %v2804
    %2822 = vmatpush.bf16.msra.mxu0 %v2803
    %2823 = vmatpush.bf16.msra.mxu0 %v2802
    %2824 = vmatpush.bf16.msra.mxu0 %v2801
    %2825 = vmatmul.bf16.gmra.mxu0 %v2748
    %v2826 = vpop.f32.mrf.mxu0
    %v2827 = vadd.f32 %v2767, %v2826
    %v2828 = vpop.f32.mrf.mxu0
    %2829 = vdwg.mxu0
    %v2830 = vld [vmem:[%s6] sm:$0x3]
    %v2831 = vmul.f32 %v2830, %v2827
    %vm2832 = vcmp.gt.f32.partialorder %v2831, 20.0
    %v2833 = vmin.f32 %v2831, 20.0
    %v2834 = vmul.f32 %v2833, 1.442695
    %v2835 = vpow.pop %v2834
    %v2836 = vadd.f32 %v2835, 1.0
    %v2837 = vlog2.pop %v2836
    %v2838 = vmul.f32 %v2837, 0.6931472
    %v2839 = vmul.f32 -0.5, %v2835
    %v2840 = vadd.f32 %v2839, 1.0
    %v2841 = vmul.f32 %v2840, %v2835
    %v2842 = vand.u32 2147483647, %v2835
    %vm2843 = vcmp.lt.f32.partialorder %v2842, 0.0004427343
    %v2844 = vsel %vm2843, %v2841, %v2838
    %v2845 = vsel %vm2832, %v2831, %v2844
    %v2846 = vpack.c.bf16 %v2845, %v2845
    %v2847 = vld [vmem:[%s19] sm:$0xf]
    %v2848 = vld [vmem:[%s19 + $0x4] sm:$0xf]
    %v2849 = vld [vmem:[%s19 + $0x8] sm:$0xf]
    %v2850 = vld [vmem:[%s19 + $0xc] sm:$0xf]
    %v2851 = vld [vmem:[%s19 + $0x10] sm:$0xf]
    %v2852 = vld [vmem:[%s19 + $0x14] sm:$0xf]
    %v2853 = vld [vmem:[%s19 + $0x18] sm:$0xf]
    %v2854 = vld [vmem:[%s19 + $0x1c] sm:$0xf]
    %v2855 = vld [vmem:[%s19 + $0x20] sm:$0xf]
    %v2856 = vld [vmem:[%s19 + $0x24] sm:$0xf]
    %v2857 = vld [vmem:[%s19 + $0x28] sm:$0xf]
    %v2858 = vld [vmem:[%s19 + $0x2c] sm:$0xf]
    %v2859 = vld [vmem:[%s19 + $0x30] sm:$0xf]
    %v2860 = vld [vmem:[%s19 + $0x34] sm:$0xf]
    %v2861 = vld [vmem:[%s19 + $0x38] sm:$0xf]
    %v2862 = vld [vmem:[%s19 + $0x3c] sm:$0xf]
    %v2863 = vld [vmem:[%s20] sm:$0x1]
    %v2865 = vperm.slane %v2863, 0
    %v2883 = vunpack.c.l.b16 %v2847
    %v2884 = vunpack.c.l.b16 %v2848
    %v2885 = vunpack.c.l.b16 %v2849
    %v2886 = vunpack.c.l.b16 %v2850
    %v2887 = vunpack.c.l.b16 %v2851
    %v2888 = vunpack.c.l.b16 %v2852
    %v2889 = vunpack.c.l.b16 %v2853
    %v2890 = vunpack.c.l.b16 %v2854
    %v2891 = vunpack.c.l.b16 %v2855
    %v2892 = vunpack.c.l.b16 %v2856
    %v2893 = vunpack.c.l.b16 %v2857
    %v2894 = vunpack.c.l.b16 %v2858
    %v2895 = vunpack.c.l.b16 %v2859
    %v2896 = vunpack.c.l.b16 %v2860
    %v2897 = vunpack.c.l.b16 %v2861
    %v2898 = vunpack.c.l.b16 %v2862
    %v2899 = vpack.c.b16 %v2884, %v2883
    %v2900 = vpack.c.b16 %v2886, %v2885
    %v2901 = vpack.c.b16 %v2888, %v2887
    %v2902 = vpack.c.b16 %v2890, %v2889
    %v2903 = vpack.c.b16 %v2892, %v2891
    %v2904 = vpack.c.b16 %v2894, %v2893
    %v2905 = vpack.c.b16 %v2896, %v2895
    %v2906 = vpack.c.b16 %v2898, %v2897
    %2915 = vmatpush.bf16.msra.mxu0 %v2906
    %2916 = vmatpush.bf16.msra.mxu0 %v2905
    %2917 = vmatpush.bf16.msra.mxu0 %v2904
    %2918 = vmatpush.bf16.msra.mxu0 %v2903
    %2919 = vmatpush.bf16.msra.mxu0 %v2902
    %2920 = vmatpush.bf16.msra.mxu0 %v2901
    %2921 = vmatpush.bf16.msra.mxu0 %v2900
    %2922 = vmatpush.bf16.msra.mxu0 %v2899
    %2923 = vmatmul.bf16.gmra.mxu0 %v2846
    %v2924 = vpop.f32.mrf.mxu0
    %v2925 = vadd.f32 %v2865, %v2924
    %v2926 = vpop.f32.mrf.mxu0
    %2927 = vdwg.mxu0
    %2928 = vst [vmem:[#allocation2] sm:$0x3] %v2925
    // Predicated region
    $region86: #{forward.1} parent=1 // pred_check
      _
    $region87: #{forward.1} parent=1 // pred_check_branch
      %2930 = sbr.rel (0) target = $region89
    $region88: #{forward.1} parent=1 // pred_region
      %2932 = vsyncadd [#allocation3], 0
      %s2934 = sshll.u32 [#allocation2], 4
      %s2935 = int_to_ptr.vmem [resolvable:$true] %s2934
      %s2936 = sshll.u32 %s21, 4
      %s2937 = int_to_ptr.hbm [resolvable:$true] %s2936
      %2939 = dma.vmem_to_hbm [thread:$0]  %s2935, 32, %s2937, [#allocation3]
    $region89: #{forward.1} parent=1 // pred_fallthru
      _
    // Predicated region
    $region90: #{forward.1} parent=1 // pred_check
      _
    $region91: #{forward.1} parent=1 // pred_check_branch
      %2941 = sbr.rel (0) target = $region93
    $region92: #{forward.1} parent=1 // pred_region
      %2943 = dma.done [#allocation3], 32
    $region93: #{forward.1} parent=1 // pred_fallthru
      _
    %2944 = vsyncpa [#allocation3], 1

</llo_original>
